<compile_context>
chip_gen: v5e
topology: v5e:2x2
jax: 0.10.0
libtpu: 0.0.40
codegen_flags: <defaults>
</compile_context>

<pallas_src>
import jax
import jax.numpy as jnp
from jax import lax
from jax.experimental import pallas as pl
from jax.experimental.pallas import tpu as pltpu  # noqa: F401  (kept for parity / future use)

ODE_UNFOLDS = 6
EPSILON = 1e-8


def _recip(x):
    """EUP approx reciprocal + one Newton-Raphson step (full f32 accuracy)."""
    r = pl.reciprocal(x, approx=True)
    return r * (2.0 - x * r)


# ----------------------------------------------------------------------------
# Kernel: grid-less; the whole (T,B,*) sequence and all params are VMEM
# resident; lax.fori_loop carries v_pre across timesteps.
# ----------------------------------------------------------------------------
def ltc_seq_kernel(x_ref,      # (T, B, F)   inputs
                   ts_ref,     # (T, B, 1)   elapsed times
                   hx0_ref,    # (B, U)      initial hidden state
                   rec_ref,    # (4U, U)     [sigma^T; mu^T; w^T; erev^T]  (post, pre)
                   sens_ref,   # (4F, U)     [s_sigma; s_mu; s_w; s_erev]  (pre=F, post=U)
                   unit_ref,   # (3, U)      [gleak; vleak; cm]
                   iw_ref,     # (2, F)      [input_w; input_b]
                   out_ref):   # (T, B, U)   hidden state per step
    T = x_ref.shape[0]
    U = hx0_ref.shape[1]
    F = iw_ref.shape[1]

    # ---- parameters: loaded and broadcast ONCE, reused across all timesteps.
    rec = rec_ref[...]                              # (4U, U)
    sigma_t = rec[0 * U:1 * U, :][None]             # (1, U_post, U_pre)
    mu_t = rec[1 * U:2 * U, :][None]                # (1, U_post, U_pre)
    w_t = rec[2 * U:3 * U, :]                       # (U_post, U_pre)
    erev_t = rec[3 * U:4 * U, :]                    # (U_post, U_pre)
    w_erev_b = (w_t * erev_t)[None]                 # (1, U_post, U_pre)
    w_b = w_t[None]                                 # (1, U_post, U_pre)

    sens = sens_ref[...]                            # (4F, U)
    s_sigma = sens[0 * F:1 * F, :][None]            # (1, F, U)
    s_mu = sens[1 * F:2 * F, :][None]               # (1, F, U)
    s_w = sens[2 * F:3 * F, :][None]                # (1, F, U)
    s_erev = sens[3 * F:4 * F, :][None]             # (1, F, U)

    unit = unit_ref[...]                            # (3, U)
    gleak = unit[0:1, :]                            # (1, U)
    vleak = unit[1:2, :]
    cm = unit[2:3, :]
    gleak_vleak = gleak * vleak                     # (1, U)

    iw = iw_ref[...]                                # (2, F)
    in_w = iw[0:1, :]
    in_b = iw[1:2, :]

    def step(t, v_pre):
        x = x_ref[t]                                # (B, F)
        ts = ts_ref[t]                              # (B, 1)

        # _map_inputs: inputs = input * input_w + input_b
        inputs = x * in_w + in_b                    # (B, F)

        # sensory (input -> units) synapse activations (once per timestep)
        sens_in = inputs[:, :, None]                # (B, F, 1) — off the unfold chain
        s_sig = jax.nn.sigmoid((sens_in - s_mu) * s_sigma)       # (B, F, U)
        s_act = s_w * s_sig                         # softplus == Identity
        w_num_sensory = jnp.sum(s_act * s_erev, axis=1)          # (B, U)
        w_den_sensory = jnp.sum(s_act, axis=1)                   # (B, U)

        # cm_t = cm / ((elapsed_time + 1) / ode_unfolds)
        cm_t = cm * (float(ODE_UNFOLDS) * _recip(ts + 1.0))      # (B, U)

        num_base = gleak_vleak + w_num_sensory      # (B, U)
        den_base = cm_t + gleak + w_den_sensory     # (B, U)

        # ODE unfolds (statically unrolled, 6 steps, serial in v_pre)
        for _ in range(ODE_UNFOLDS):
            # v_pre broadcasts along sublanes; no lane->sublane relayout.
            vb = v_pre[:, None, :]                                 # (B, 1, U_pre)
            w_sig = jax.nn.sigmoid((vb - mu_t) * sigma_t)          # (B, U_post, U_pre)
            w_num = jnp.sum(w_erev_b * w_sig, axis=-1)             # (B, U_post)
            w_den = jnp.sum(w_b * w_sig, axis=-1)                  # (B, U_post)

            numerator = cm_t * v_pre + num_base + w_num
            denominator = den_base + w_den
            v_pre = numerator * _recip(denominator + EPSILON)

        out_ref[t] = v_pre
        return v_pre

    unroll = 2 if (T % 2 == 0 and T >= 2) else 1
    lax.fori_loop(0, T, step, hx0_ref[...], unroll=unroll)


# ----------------------------------------------------------------------------
# Host-side packing of the 13 small parameters into 4 DMA slabs.
# ----------------------------------------------------------------------------
def pack_params(params, F, U):
    f32 = lambda a: a.astype(jnp.float32)
    rec = jnp.concatenate([f32(params['sigma']).T, f32(params['mu']).T,
                           f32(params['w']).T, f32(params['erev']).T], axis=0)      # (4U, U)
    sens = jnp.concatenate([f32(params['sensory_sigma']), f32(params['sensory_mu']),
                            f32(params['sensory_w']), f32(params['sensory_erev'])],
                           axis=0)                                                  # (4F, U)
    unit = jnp.stack([f32(params['gleak']), f32(params['vleak']),
                      f32(params['cm'])], axis=0)                                   # (3, U)
    iw = jnp.stack([f32(params['input_w']), f32(params['input_b'])], axis=0)        # (2, F)
    return rec, sens, unit, iw


def _cost_estimate(T, B, F, U):
    per_step_flops = 7 * B * F * U + ODE_UNFOLDS * 7 * B * U * U + 16 * B * U
    per_step_trans = B * F * U + ODE_UNFOLDS * B * U * U + B + ODE_UNFOLDS * B * U
    bytes_accessed = 4 * (T * B * F + T * B + B * U
                          + 4 * U * U + 4 * F * U + 3 * U + 2 * F
                          + T * B * U)
    return pl.CostEstimate(flops=int(T * per_step_flops),
                           transcendentals=int(T * per_step_trans),
                           bytes_accessed=int(bytes_accessed))


def ltc_sequence_forward(xs, hx0, ts_seq, params):
    """Run the LTC cell over a sequence in ONE grid-less pallas_call.

    xs:     (T, B, F) inputs
    hx0:    (B, U)    initial hidden state
    ts_seq: (T, B)    elapsed times
    returns (T, B, U) hidden states (out[t] == forward(xs[t], out[t-1], ts[t]))
    """
    T, B, F = xs.shape
    U = hx0.shape[1]
    rec, sens, unit, iw = pack_params(params, F, U)
    ts3 = ts_seq.reshape(T, B, 1).astype(jnp.float32)

    return pl.pallas_call(
        ltc_seq_kernel,
        out_shape=jax.ShapeDtypeStruct((T, B, U), jnp.float32),
        cost_estimate=_cost_estimate(T, B, F, U),
    )(xs.astype(jnp.float32), ts3, hx0.astype(jnp.float32), rec, sens, unit, iw)


def ltc_cell_forward(x, hx, ts, params):
    """Pallas-backed LTCCell.forward(input, hx, ts) — the T=1 special case."""
    B = x.shape[0]
    out = ltc_sequence_forward(x[None], hx, ts.reshape(1, B), params)
    return out[0]


# ----------------------------------------------------------------------------
# Pure-JAX mirror of the PyTorch forward (for correctness checks).
# ----------------------------------------------------------------------------
def ltc_cell_reference(x, hx, ts, params):
    ts = ts.reshape(-1, 1)
    inputs = x * params['input_w'] + params['input_b']
    v_pre = hx
    s_sig = jax.nn.sigmoid(
        (inputs[:, :, None] - params['sensory_mu'][None]) * params['sensory_sigma'][None])
    s_act = params['sensory_w'][None] * s_sig
    w_num_s = jnp.sum(s_act * params['sensory_erev'][None], axis=1)
    w_den_s = jnp.sum(s_act, axis=1)
    cm_t = params['cm'][None, :] / ((ts + 1.0) / float(ODE_UNFOLDS))
    for _ in range(ODE_UNFOLDS):
        w_sig = jax.nn.sigmoid(
            (v_pre[:, :, None] - params['mu'][None]) * params['sigma'][None])
        w_act = params['w'][None] * w_sig
        w_num = jnp.sum(w_act * params['erev'][None], axis=1) + w_num_s
        w_den = jnp.sum(w_act, axis=1) + w_den_s
        num = cm_t * v_pre + params['gleak'][None, :] * params['vleak'][None, :] + w_num
        den = cm_t + params['gleak'][None, :] + w_den
        v_pre = num / (den + EPSILON)
    return v_pre


def init_params(key, in_features, units):
    """Deterministic synthetic init following LTCCell._init_ranges."""
    ks = jax.random.split(key, 11)

    def uni(k, shape, lo, hi):
        return jax.random.uniform(k, shape, jnp.float32, lo, hi)

    F, U = in_features, units
    return {
        'gleak': uni(ks[0], (U,), 0.001, 1.0),
        'vleak': uni(ks[1], (U,), -0.2, 0.2),
        'cm': uni(ks[2], (U,), 0.4, 0.6),
        'sigma': uni(ks[3], (U, U), 3.0, 8.0),
        'mu': uni(ks[4], (U, U), 0.3, 0.8),
        'w': uni(ks[5], (U, U), 0.001, 1.0),
        'erev': jnp.where(jax.random.bernoulli(ks[6], 0.5, (U, U)), 1.0, -1.0).astype(jnp.float32),
        'sensory_sigma': uni(ks[7], (F, U), 3.0, 8.0),
        'sensory_mu': uni(ks[8], (F, U), 0.3, 0.8),
        'sensory_w': uni(ks[9], (F, U), 0.001, 1.0),
        'sensory_erev': jnp.where(jax.random.bernoulli(ks[10], 0.5, (F, U)), 1.0, -1.0).astype(jnp.float32),
        'input_w': jnp.ones((F,), jnp.float32),
        'input_b': jnp.zeros((F,), jnp.float32),
    }


if __name__ == "__main__":
    B, F, U, T = 2, 8, 32, 8  # batch, in_features (sensory), units, sequence length

    key = jax.random.PRNGKey(0)
    kp, kx, kh, kt, kxs, kts = jax.random.split(key, 6)

    params = init_params(kp, F, U)

    # ---- single-step forward (LTCCell.forward semantics) ----
    x = jax.random.uniform(kx, (B, F), jnp.float32, -1.0, 1.0)
    hx = jax.random.uniform(kh, (B, U), jnp.float32, -0.2, 0.2)
    ts = jax.random.uniform(kt, (B,), jnp.float32, 0.5, 1.5)

    out = jax.block_until_ready(ltc_cell_forward(x, hx, ts, params))
    ref = ltc_cell_reference(x, hx, ts, params)
    assert out.shape == (B, U) and out.dtype == jnp.float32
    assert jnp.allclose(out, ref, rtol=1e-4, atol=2e-5), "single-step mismatch vs JAX reference"

    # ---- fused sequence: T cell applications in one pallas_call ----
    xs = jax.random.uniform(kxs, (T, B, F), jnp.float32, -1.0, 1.0)
    ts_seq = jax.random.uniform(kts, (T, B), jnp.float32, 0.5, 1.5)

    seq_out = jax.block_until_ready(ltc_sequence_forward(xs, hx, ts_seq, params))

    v = hx
    refs = []
    for step in range(T):
        v = ltc_cell_reference(xs[step], v, ts_seq[step], params)
        refs.append(v)
    seq_ref = jnp.stack(refs, axis=0)

    assert seq_out.shape == (T, B, U) and seq_out.dtype == jnp.float32
    assert jnp.allclose(seq_out, seq_ref, rtol=1e-4, atol=5e-5), "sequence mismatch vs JAX reference"

    print("KERNEL_OK")
</pallas_src>

<mosaic_0001>
module attributes {stable_mosaic.version = 11 : i64} {
  func.func @ltc_seq_kernel(%arg0: memref<1x2x8xf32, #tpu.memory_space<vmem>>, %arg1: memref<1x2x1xf32, #tpu.memory_space<vmem>>, %arg2: memref<2x32xf32, #tpu.memory_space<vmem>>, %arg3: memref<128x32xf32, #tpu.memory_space<vmem>>, %arg4: memref<32x32xf32, #tpu.memory_space<vmem>>, %arg5: memref<3x32xf32, #tpu.memory_space<vmem>>, %arg6: memref<2x8xf32, #tpu.memory_space<vmem>>, %arg7: memref<1x2x32xf32, #tpu.memory_space<vmem>>) attributes {dimension_semantics = [], scalar_prefetch = 0 : i64, scratch_operands = 0 : i64, tpu.core_type = #tpu.core_type<tc>} {
    %c0 = arith.constant 0 : index
    %c0_0 = arith.constant 0 : index
    %0 = vector.load %arg3[%c0, %c0_0] : memref<128x32xf32, #tpu.memory_space<vmem>>, vector<128x32xf32>
    %1 = vector.extract_strided_slice %0 {offsets = [0, 0], sizes = [32, 32], strides = [1, 1]} : vector<128x32xf32> to vector<32x32xf32>
    %2 = vector.shape_cast %1 : vector<32x32xf32> to vector<1x32x32xf32>
    %3 = vector.extract_strided_slice %0 {offsets = [32, 0], sizes = [32, 32], strides = [1, 1]} : vector<128x32xf32> to vector<32x32xf32>
    %4 = vector.shape_cast %3 : vector<32x32xf32> to vector<1x32x32xf32>
    %5 = vector.extract_strided_slice %0 {offsets = [64, 0], sizes = [32, 32], strides = [1, 1]} : vector<128x32xf32> to vector<32x32xf32>
    %6 = vector.extract_strided_slice %0 {offsets = [96, 0], sizes = [32, 32], strides = [1, 1]} : vector<128x32xf32> to vector<32x32xf32>
    %7 = arith.mulf %5, %6 : vector<32x32xf32>
    %8 = vector.shape_cast %7 : vector<32x32xf32> to vector<1x32x32xf32>
    %9 = vector.shape_cast %5 : vector<32x32xf32> to vector<1x32x32xf32>
    %c0_1 = arith.constant 0 : index
    %c0_2 = arith.constant 0 : index
    %10 = vector.load %arg4[%c0_1, %c0_2] : memref<32x32xf32, #tpu.memory_space<vmem>>, vector<32x32xf32>
    %11 = vector.extract_strided_slice %10 {offsets = [0, 0], sizes = [8, 32], strides = [1, 1]} : vector<32x32xf32> to vector<8x32xf32>
    %12 = vector.shape_cast %11 : vector<8x32xf32> to vector<1x8x32xf32>
    %13 = vector.extract_strided_slice %10 {offsets = [8, 0], sizes = [8, 32], strides = [1, 1]} : vector<32x32xf32> to vector<8x32xf32>
    %14 = vector.shape_cast %13 : vector<8x32xf32> to vector<1x8x32xf32>
    %15 = vector.extract_strided_slice %10 {offsets = [16, 0], sizes = [8, 32], strides = [1, 1]} : vector<32x32xf32> to vector<8x32xf32>
    %16 = vector.shape_cast %15 : vector<8x32xf32> to vector<1x8x32xf32>
    %17 = vector.extract_strided_slice %10 {offsets = [24, 0], sizes = [8, 32], strides = [1, 1]} : vector<32x32xf32> to vector<8x32xf32>
    %18 = vector.shape_cast %17 : vector<8x32xf32> to vector<1x8x32xf32>
    %c0_3 = arith.constant 0 : index
    %c0_4 = arith.constant 0 : index
    %19 = vector.load %arg5[%c0_3, %c0_4] : memref<3x32xf32, #tpu.memory_space<vmem>>, vector<3x32xf32>
    %20 = vector.extract_strided_slice %19 {offsets = [0, 0], sizes = [1, 32], strides = [1, 1]} : vector<3x32xf32> to vector<1x32xf32>
    %21 = vector.extract_strided_slice %19 {offsets = [1, 0], sizes = [1, 32], strides = [1, 1]} : vector<3x32xf32> to vector<1x32xf32>
    %22 = vector.extract_strided_slice %19 {offsets = [2, 0], sizes = [1, 32], strides = [1, 1]} : vector<3x32xf32> to vector<1x32xf32>
    %23 = arith.mulf %20, %21 : vector<1x32xf32>
    %c0_5 = arith.constant 0 : index
    %c0_6 = arith.constant 0 : index
    %24 = vector.load %arg6[%c0_5, %c0_6] : memref<2x8xf32, #tpu.memory_space<vmem>>, vector<2x8xf32>
    %25 = vector.extract_strided_slice %24 {offsets = [0, 0], sizes = [1, 8], strides = [1, 1]} : vector<2x8xf32> to vector<1x8xf32>
    %26 = vector.extract_strided_slice %24 {offsets = [1, 0], sizes = [1, 8], strides = [1, 1]} : vector<2x8xf32> to vector<1x8xf32>
    %c0_7 = arith.constant 0 : index
    %c0_8 = arith.constant 0 : index
    %27 = vector.load %arg2[%c0_7, %c0_8] : memref<2x32xf32, #tpu.memory_space<vmem>>, vector<2x32xf32>
    %c0_i32 = arith.constant 0 : i32
    %28 = arith.index_cast %c0_i32 : i32 to index
    %c0_9 = arith.constant 0 : index
    %c0_10 = arith.constant 0 : index
    %29 = vector.load %arg0[%28, %c0_9, %c0_10] : memref<1x2x8xf32, #tpu.memory_space<vmem>>, vector<1x2x8xf32>
    %30 = vector.shape_cast %29 : vector<1x2x8xf32> to vector<2x8xf32>
    %31 = arith.index_cast %c0_i32 : i32 to index
    %c0_11 = arith.constant 0 : index
    %c0_12 = arith.constant 0 : index
    %32 = vector.load %arg1[%31, %c0_11, %c0_12] : memref<1x2x1xf32, #tpu.memory_space<vmem>>, vector<1x2x1xf32>
    %33 = vector.shape_cast %32 : vector<1x2x1xf32> to vector<2x1xf32>
    %34 = vector.broadcast %25 : vector<1x8xf32> to vector<2x8xf32>
    %35 = arith.mulf %30, %34 : vector<2x8xf32>
    %36 = vector.broadcast %26 : vector<1x8xf32> to vector<2x8xf32>
    %37 = arith.addf %35, %36 : vector<2x8xf32>
    %38 = vector.shape_cast %37 : vector<2x8xf32> to vector<2x8x1xf32>
    %39 = vector.broadcast %38 : vector<2x8x1xf32> to vector<2x8x32xf32>
    %40 = vector.broadcast %14 : vector<1x8x32xf32> to vector<2x8x32xf32>
    %41 = arith.subf %39, %40 : vector<2x8x32xf32>
    %42 = vector.broadcast %12 : vector<1x8x32xf32> to vector<2x8x32xf32>
    %43 = arith.mulf %41, %42 : vector<2x8x32xf32>
    %44 = arith.negf %43 : vector<2x8x32xf32>
    %45 = math.exp %44 : vector<2x8x32xf32>
    %cst = arith.constant 1.000000e+00 : f32
    %46 = vector.broadcast %cst : f32 to vector<2x8x32xf32>
    %47 = arith.addf %46, %45 : vector<2x8x32xf32>
    %48 = arith.divf %46, %47 : vector<2x8x32xf32>
    %49 = vector.broadcast %16 : vector<1x8x32xf32> to vector<2x8x32xf32>
    %50 = arith.mulf %49, %48 : vector<2x8x32xf32>
    %51 = vector.broadcast %18 : vector<1x8x32xf32> to vector<2x8x32xf32>
    %52 = arith.mulf %50, %51 : vector<2x8x32xf32>
    %cst_13 = arith.constant dense<0.000000e+00> : vector<2x32xf32>
    %53 = vector.multi_reduction <add>, %52, %cst_13 [1] : vector<2x8x32xf32> to vector<2x32xf32>
    %cst_14 = arith.constant dense<0.000000e+00> : vector<2x32xf32>
    %54 = vector.multi_reduction <add>, %50, %cst_14 [1] : vector<2x8x32xf32> to vector<2x32xf32>
    %cst_15 = arith.constant 1.000000e+00 : f32
    %55 = vector.broadcast %cst_15 : f32 to vector<2x1xf32>
    %56 = arith.addf %33, %55 : vector<2x1xf32>
    %57 = tpu.reciprocal %56 {approx = true} : vector<2x1xf32> -> vector<2x1xf32>
    %58 = arith.mulf %56, %57 : vector<2x1xf32>
    %cst_16 = arith.constant 2.000000e+00 : f32
    %59 = vector.broadcast %cst_16 : f32 to vector<2x1xf32>
    %60 = arith.subf %59, %58 : vector<2x1xf32>
    %61 = arith.mulf %57, %60 : vector<2x1xf32>
    %cst_17 = arith.constant 6.000000e+00 : f32
    %62 = vector.broadcast %cst_17 : f32 to vector<2x1xf32>
    %63 = arith.mulf %62, %61 : vector<2x1xf32>
    %64 = vector.broadcast %22 : vector<1x32xf32> to vector<2x32xf32>
    %65 = vector.broadcast %63 : vector<2x1xf32> to vector<2x32xf32>
    %66 = arith.mulf %64, %65 : vector<2x32xf32>
    %67 = vector.broadcast %23 : vector<1x32xf32> to vector<2x32xf32>
    %68 = arith.addf %67, %53 : vector<2x32xf32>
    %69 = vector.broadcast %20 : vector<1x32xf32> to vector<2x32xf32>
    %70 = arith.addf %66, %69 : vector<2x32xf32>
    %71 = arith.addf %70, %54 : vector<2x32xf32>
    %72 = vector.shape_cast %27 : vector<2x32xf32> to vector<2x1x32xf32>
    %73 = vector.broadcast %72 : vector<2x1x32xf32> to vector<2x32x32xf32>
    %74 = vector.broadcast %4 : vector<1x32x32xf32> to vector<2x32x32xf32>
    %75 = arith.subf %73, %74 : vector<2x32x32xf32>
    %76 = vector.broadcast %2 : vector<1x32x32xf32> to vector<2x32x32xf32>
    %77 = arith.mulf %75, %76 : vector<2x32x32xf32>
    %78 = arith.negf %77 : vector<2x32x32xf32>
    %79 = math.exp %78 : vector<2x32x32xf32>
    %cst_18 = arith.constant 1.000000e+00 : f32
    %80 = vector.broadcast %cst_18 : f32 to vector<2x32x32xf32>
    %81 = arith.addf %80, %79 : vector<2x32x32xf32>
    %82 = arith.divf %80, %81 : vector<2x32x32xf32>
    %83 = vector.broadcast %8 : vector<1x32x32xf32> to vector<2x32x32xf32>
    %84 = arith.mulf %83, %82 : vector<2x32x32xf32>
    %cst_19 = arith.constant dense<0.000000e+00> : vector<2x32xf32>
    %85 = vector.multi_reduction <add>, %84, %cst_19 [2] : vector<2x32x32xf32> to vector<2x32xf32>
    %86 = vector.broadcast %9 : vector<1x32x32xf32> to vector<2x32x32xf32>
    %87 = arith.mulf %86, %82 : vector<2x32x32xf32>
    %cst_20 = arith.constant dense<0.000000e+00> : vector<2x32xf32>
    %88 = vector.multi_reduction <add>, %87, %cst_20 [2] : vector<2x32x32xf32> to vector<2x32xf32>
    %89 = arith.mulf %66, %27 : vector<2x32xf32>
    %90 = arith.addf %89, %68 : vector<2x32xf32>
    %91 = arith.addf %90, %85 : vector<2x32xf32>
    %92 = arith.addf %71, %88 : vector<2x32xf32>
    %cst_21 = arith.constant 9.99999993E-9 : f32
    %93 = vector.broadcast %cst_21 : f32 to vector<2x32xf32>
    %94 = arith.addf %92, %93 : vector<2x32xf32>
    %95 = tpu.reciprocal %94 {approx = true} : vector<2x32xf32> -> vector<2x32xf32>
    %96 = arith.mulf %94, %95 : vector<2x32xf32>
    %cst_22 = arith.constant 2.000000e+00 : f32
    %97 = vector.broadcast %cst_22 : f32 to vector<2x32xf32>
    %98 = arith.subf %97, %96 : vector<2x32xf32>
    %99 = arith.mulf %95, %98 : vector<2x32xf32>
    %100 = arith.mulf %91, %99 : vector<2x32xf32>
    %101 = vector.shape_cast %100 : vector<2x32xf32> to vector<2x1x32xf32>
    %102 = vector.broadcast %101 : vector<2x1x32xf32> to vector<2x32x32xf32>
    %103 = vector.broadcast %4 : vector<1x32x32xf32> to vector<2x32x32xf32>
    %104 = arith.subf %102, %103 : vector<2x32x32xf32>
    %105 = vector.broadcast %2 : vector<1x32x32xf32> to vector<2x32x32xf32>
    %106 = arith.mulf %104, %105 : vector<2x32x32xf32>
    %107 = arith.negf %106 : vector<2x32x32xf32>
    %108 = math.exp %107 : vector<2x32x32xf32>
    %cst_23 = arith.constant 1.000000e+00 : f32
    %109 = vector.broadcast %cst_23 : f32 to vector<2x32x32xf32>
    %110 = arith.addf %109, %108 : vector<2x32x32xf32>
    %111 = arith.divf %109, %110 : vector<2x32x32xf32>
    %112 = vector.broadcast %8 : vector<1x32x32xf32> to vector<2x32x32xf32>
    %113 = arith.mulf %112, %111 : vector<2x32x32xf32>
    %cst_24 = arith.constant dense<0.000000e+00> : vector<2x32xf32>
    %114 = vector.multi_reduction <add>, %113, %cst_24 [2] : vector<2x32x32xf32> to vector<2x32xf32>
    %115 = vector.broadcast %9 : vector<1x32x32xf32> to vector<2x32x32xf32>
    %116 = arith.mulf %115, %111 : vector<2x32x32xf32>
    %cst_25 = arith.constant dense<0.000000e+00> : vector<2x32xf32>
    %117 = vector.multi_reduction <add>, %116, %cst_25 [2] : vector<2x32x32xf32> to vector<2x32xf32>
    %118 = arith.mulf %66, %100 : vector<2x32xf32>
    %119 = arith.addf %118, %68 : vector<2x32xf32>
    %120 = arith.addf %119, %114 : vector<2x32xf32>
    %121 = arith.addf %71, %117 : vector<2x32xf32>
    %cst_26 = arith.constant 9.99999993E-9 : f32
    %122 = vector.broadcast %cst_26 : f32 to vector<2x32xf32>
    %123 = arith.addf %121, %122 : vector<2x32xf32>
    %124 = tpu.reciprocal %123 {approx = true} : vector<2x32xf32> -> vector<2x32xf32>
    %125 = arith.mulf %123, %124 : vector<2x32xf32>
    %cst_27 = arith.constant 2.000000e+00 : f32
    %126 = vector.broadcast %cst_27 : f32 to vector<2x32xf32>
    %127 = arith.subf %126, %125 : vector<2x32xf32>
    %128 = arith.mulf %124, %127 : vector<2x32xf32>
    %129 = arith.mulf %120, %128 : vector<2x32xf32>
    %130 = vector.shape_cast %129 : vector<2x32xf32> to vector<2x1x32xf32>
    %131 = vector.broadcast %130 : vector<2x1x32xf32> to vector<2x32x32xf32>
    %132 = vector.broadcast %4 : vector<1x32x32xf32> to vector<2x32x32xf32>
    %133 = arith.subf %131, %132 : vector<2x32x32xf32>
    %134 = vector.broadcast %2 : vector<1x32x32xf32> to vector<2x32x32xf32>
    %135 = arith.mulf %133, %134 : vector<2x32x32xf32>
    %136 = arith.negf %135 : vector<2x32x32xf32>
    %137 = math.exp %136 : vector<2x32x32xf32>
    %cst_28 = arith.constant 1.000000e+00 : f32
    %138 = vector.broadcast %cst_28 : f32 to vector<2x32x32xf32>
    %139 = arith.addf %138, %137 : vector<2x32x32xf32>
    %140 = arith.divf %138, %139 : vector<2x32x32xf32>
    %141 = vector.broadcast %8 : vector<1x32x32xf32> to vector<2x32x32xf32>
    %142 = arith.mulf %141, %140 : vector<2x32x32xf32>
    %cst_29 = arith.constant dense<0.000000e+00> : vector<2x32xf32>
    %143 = vector.multi_reduction <add>, %142, %cst_29 [2] : vector<2x32x32xf32> to vector<2x32xf32>
    %144 = vector.broadcast %9 : vector<1x32x32xf32> to vector<2x32x32xf32>
    %145 = arith.mulf %144, %140 : vector<2x32x32xf32>
    %cst_30 = arith.constant dense<0.000000e+00> : vector<2x32xf32>
    %146 = vector.multi_reduction <add>, %145, %cst_30 [2] : vector<2x32x32xf32> to vector<2x32xf32>
    %147 = arith.mulf %66, %129 : vector<2x32xf32>
    %148 = arith.addf %147, %68 : vector<2x32xf32>
    %149 = arith.addf %148, %143 : vector<2x32xf32>
    %150 = arith.addf %71, %146 : vector<2x32xf32>
    %cst_31 = arith.constant 9.99999993E-9 : f32
    %151 = vector.broadcast %cst_31 : f32 to vector<2x32xf32>
    %152 = arith.addf %150, %151 : vector<2x32xf32>
    %153 = tpu.reciprocal %152 {approx = true} : vector<2x32xf32> -> vector<2x32xf32>
    %154 = arith.mulf %152, %153 : vector<2x32xf32>
    %cst_32 = arith.constant 2.000000e+00 : f32
    %155 = vector.broadcast %cst_32 : f32 to vector<2x32xf32>
    %156 = arith.subf %155, %154 : vector<2x32xf32>
    %157 = arith.mulf %153, %156 : vector<2x32xf32>
    %158 = arith.mulf %149, %157 : vector<2x32xf32>
    %159 = vector.shape_cast %158 : vector<2x32xf32> to vector<2x1x32xf32>
    %160 = vector.broadcast %159 : vector<2x1x32xf32> to vector<2x32x32xf32>
    %161 = vector.broadcast %4 : vector<1x32x32xf32> to vector<2x32x32xf32>
    %162 = arith.subf %160, %161 : vector<2x32x32xf32>
    %163 = vector.broadcast %2 : vector<1x32x32xf32> to vector<2x32x32xf32>
    %164 = arith.mulf %162, %163 : vector<2x32x32xf32>
    %165 = arith.negf %164 : vector<2x32x32xf32>
    %166 = math.exp %165 : vector<2x32x32xf32>
    %cst_33 = arith.constant 1.000000e+00 : f32
    %167 = vector.broadcast %cst_33 : f32 to vector<2x32x32xf32>
    %168 = arith.addf %167, %166 : vector<2x32x32xf32>
    %169 = arith.divf %167, %168 : vector<2x32x32xf32>
    %170 = vector.broadcast %8 : vector<1x32x32xf32> to vector<2x32x32xf32>
    %171 = arith.mulf %170, %169 : vector<2x32x32xf32>
    %cst_34 = arith.constant dense<0.000000e+00> : vector<2x32xf32>
    %172 = vector.multi_reduction <add>, %171, %cst_34 [2] : vector<2x32x32xf32> to vector<2x32xf32>
    %173 = vector.broadcast %9 : vector<1x32x32xf32> to vector<2x32x32xf32>
    %174 = arith.mulf %173, %169 : vector<2x32x32xf32>
    %cst_35 = arith.constant dense<0.000000e+00> : vector<2x32xf32>
    %175 = vector.multi_reduction <add>, %174, %cst_35 [2] : vector<2x32x32xf32> to vector<2x32xf32>
    %176 = arith.mulf %66, %158 : vector<2x32xf32>
    %177 = arith.addf %176, %68 : vector<2x32xf32>
    %178 = arith.addf %177, %172 : vector<2x32xf32>
    %179 = arith.addf %71, %175 : vector<2x32xf32>
    %cst_36 = arith.constant 9.99999993E-9 : f32
    %180 = vector.broadcast %cst_36 : f32 to vector<2x32xf32>
    %181 = arith.addf %179, %180 : vector<2x32xf32>
    %182 = tpu.reciprocal %181 {approx = true} : vector<2x32xf32> -> vector<2x32xf32>
    %183 = arith.mulf %181, %182 : vector<2x32xf32>
    %cst_37 = arith.constant 2.000000e+00 : f32
    %184 = vector.broadcast %cst_37 : f32 to vector<2x32xf32>
    %185 = arith.subf %184, %183 : vector<2x32xf32>
    %186 = arith.mulf %182, %185 : vector<2x32xf32>
    %187 = arith.mulf %178, %186 : vector<2x32xf32>
    %188 = vector.shape_cast %187 : vector<2x32xf32> to vector<2x1x32xf32>
    %189 = vector.broadcast %188 : vector<2x1x32xf32> to vector<2x32x32xf32>
    %190 = vector.broadcast %4 : vector<1x32x32xf32> to vector<2x32x32xf32>
    %191 = arith.subf %189, %190 : vector<2x32x32xf32>
    %192 = vector.broadcast %2 : vector<1x32x32xf32> to vector<2x32x32xf32>
    %193 = arith.mulf %191, %192 : vector<2x32x32xf32>
    %194 = arith.negf %193 : vector<2x32x32xf32>
    %195 = math.exp %194 : vector<2x32x32xf32>
    %cst_38 = arith.constant 1.000000e+00 : f32
    %196 = vector.broadcast %cst_38 : f32 to vector<2x32x32xf32>
    %197 = arith.addf %196, %195 : vector<2x32x32xf32>
    %198 = arith.divf %196, %197 : vector<2x32x32xf32>
    %199 = vector.broadcast %8 : vector<1x32x32xf32> to vector<2x32x32xf32>
    %200 = arith.mulf %199, %198 : vector<2x32x32xf32>
    %cst_39 = arith.constant dense<0.000000e+00> : vector<2x32xf32>
    %201 = vector.multi_reduction <add>, %200, %cst_39 [2] : vector<2x32x32xf32> to vector<2x32xf32>
    %202 = vector.broadcast %9 : vector<1x32x32xf32> to vector<2x32x32xf32>
    %203 = arith.mulf %202, %198 : vector<2x32x32xf32>
    %cst_40 = arith.constant dense<0.000000e+00> : vector<2x32xf32>
    %204 = vector.multi_reduction <add>, %203, %cst_40 [2] : vector<2x32x32xf32> to vector<2x32xf32>
    %205 = arith.mulf %66, %187 : vector<2x32xf32>
    %206 = arith.addf %205, %68 : vector<2x32xf32>
    %207 = arith.addf %206, %201 : vector<2x32xf32>
    %208 = arith.addf %71, %204 : vector<2x32xf32>
    %cst_41 = arith.constant 9.99999993E-9 : f32
    %209 = vector.broadcast %cst_41 : f32 to vector<2x32xf32>
    %210 = arith.addf %208, %209 : vector<2x32xf32>
    %211 = tpu.reciprocal %210 {approx = true} : vector<2x32xf32> -> vector<2x32xf32>
    %212 = arith.mulf %210, %211 : vector<2x32xf32>
    %cst_42 = arith.constant 2.000000e+00 : f32
    %213 = vector.broadcast %cst_42 : f32 to vector<2x32xf32>
    %214 = arith.subf %213, %212 : vector<2x32xf32>
    %215 = arith.mulf %211, %214 : vector<2x32xf32>
    %216 = arith.mulf %207, %215 : vector<2x32xf32>
    %217 = vector.shape_cast %216 : vector<2x32xf32> to vector<2x1x32xf32>
    %218 = vector.broadcast %217 : vector<2x1x32xf32> to vector<2x32x32xf32>
    %219 = vector.broadcast %4 : vector<1x32x32xf32> to vector<2x32x32xf32>
    %220 = arith.subf %218, %219 : vector<2x32x32xf32>
    %221 = vector.broadcast %2 : vector<1x32x32xf32> to vector<2x32x32xf32>
    %222 = arith.mulf %220, %221 : vector<2x32x32xf32>
    %223 = arith.negf %222 : vector<2x32x32xf32>
    %224 = math.exp %223 : vector<2x32x32xf32>
    %cst_43 = arith.constant 1.000000e+00 : f32
    %225 = vector.broadcast %cst_43 : f32 to vector<2x32x32xf32>
    %226 = arith.addf %225, %224 : vector<2x32x32xf32>
    %227 = arith.divf %225, %226 : vector<2x32x32xf32>
    %228 = vector.broadcast %8 : vector<1x32x32xf32> to vector<2x32x32xf32>
    %229 = arith.mulf %228, %227 : vector<2x32x32xf32>
    %cst_44 = arith.constant dense<0.000000e+00> : vector<2x32xf32>
    %230 = vector.multi_reduction <add>, %229, %cst_44 [2] : vector<2x32x32xf32> to vector<2x32xf32>
    %231 = vector.broadcast %9 : vector<1x32x32xf32> to vector<2x32x32xf32>
    %232 = arith.mulf %231, %227 : vector<2x32x32xf32>
    %cst_45 = arith.constant dense<0.000000e+00> : vector<2x32xf32>
    %233 = vector.multi_reduction <add>, %232, %cst_45 [2] : vector<2x32x32xf32> to vector<2x32xf32>
    %234 = arith.mulf %66, %216 : vector<2x32xf32>
    %235 = arith.addf %234, %68 : vector<2x32xf32>
    %236 = arith.addf %235, %230 : vector<2x32xf32>
    %237 = arith.addf %71, %233 : vector<2x32xf32>
    %cst_46 = arith.constant 9.99999993E-9 : f32
    %238 = vector.broadcast %cst_46 : f32 to vector<2x32xf32>
    %239 = arith.addf %237, %238 : vector<2x32xf32>
    %240 = tpu.reciprocal %239 {approx = true} : vector<2x32xf32> -> vector<2x32xf32>
    %241 = arith.mulf %239, %240 : vector<2x32xf32>
    %cst_47 = arith.constant 2.000000e+00 : f32
    %242 = vector.broadcast %cst_47 : f32 to vector<2x32xf32>
    %243 = arith.subf %242, %241 : vector<2x32xf32>
    %244 = arith.mulf %240, %243 : vector<2x32xf32>
    %245 = arith.mulf %236, %244 : vector<2x32xf32>
    %246 = arith.index_cast %c0_i32 : i32 to index
    %c0_48 = arith.constant 0 : index
    %c0_49 = arith.constant 0 : index
    %247 = vector.load %arg7[%246, %c0_48, %c0_49] : memref<1x2x32xf32, #tpu.memory_space<vmem>>, vector<1x2x32xf32>
    %248 = vector.shape_cast %247 : vector<1x2x32xf32> to vector<2x32xf32>
    %249 = vector.shape_cast %245 : vector<2x32xf32> to vector<1x2x32xf32>
    tpu.vector_store %arg7[%246, %c0_48, %c0_49], %249 {strides = array<i32>} : memref<1x2x32xf32, #tpu.memory_space<vmem>>, vector<1x2x32xf32>,
    %c1_i32 = arith.constant 1 : i32
    return
  }
}

</mosaic_0001>

<llo_original>
// kernel: tpu_custom_call.1
$region0: #{tpu_custom_call.1}
  #allocation0 [shape = 'u32[]', space=smem, size = 0x4, offset = 0x4, fixed_abs, tag = 'smem constant byte address 0x4 - core index']
  #allocation1 [shape = 'u32[72,128]{1,0:T(1,128)}', space=vmem, size = 0x9000, scoped, tag = 'internal scratch']
  %s0 = inlined_call_operand.vmem [shape: f32[1,2,8], index: 0, kind: input, shape index: {}]
  %s1 = inlined_call_operand.vmem [shape: f32[1,2,1], index: 1, kind: input, shape index: {}]
  %s2 = inlined_call_operand.vmem [shape: f32[2,32], index: 2, kind: input, shape index: {}]
  %s3 = inlined_call_operand.vmem [shape: f32[128,32], index: 3, kind: input, shape index: {}]
  %s4 = inlined_call_operand.vmem [shape: f32[32,32], index: 4, kind: input, shape index: {}]
  %s5 = inlined_call_operand.vmem [shape: f32[3,32], index: 5, kind: input, shape index: {}]
  %s6 = inlined_call_operand.vmem [shape: f32[2,8], index: 6, kind: input, shape index: {}]
  %s7 = inlined_call_operand.hbm [shape: f32[1,2,32], index: 7, kind: output, shape index: {}]
  %s8 = sld [smem:[#allocation0]]
  $region38: #{tpu_custom_call.1} parent=0
    _
  %s10 = ssub.s32 1, %s8
  %s11 = scalar_select 0, %s10, %s8
  $region1: #{tpu_custom_call.1} parent=0
    #allocation2 [shape = 'u8[1024]{0}', space=vmem, size = 0x400, scoped, tag = 'output window, operand 0, single buffered']
    #allocation3 [shape = 's32[1]{0}', space=sflag, size = 0x4, scoped, tag = 'scoped memory for tpu_custom_call.1']
    %12 = vsyncpa [#allocation3], 0
    // Predicated region
    $region2: #{tpu_custom_call.1} parent=1 // pred_check
      _
    $region3: #{tpu_custom_call.1} parent=1 // pred_check_branch
      %14 = sbr.rel (0) target = $region5
    $region4: #{tpu_custom_call.1} parent=1 // pred_region
      _
    $region5: #{tpu_custom_call.1} parent=1 // pred_fallthru
      _
    // Predicated region
    $region6: #{tpu_custom_call.1} parent=1 // pred_check
      _
    $region7: #{tpu_custom_call.1} parent=1 // pred_check_branch
      %16 = sbr.rel (0) target = $region9
    $region8: #{tpu_custom_call.1} parent=1 // pred_region
      _
    $region9: #{tpu_custom_call.1} parent=1 // pred_fallthru
      _
    // Predicated region
    $region10: #{tpu_custom_call.1} parent=1 // pred_check
      _
    $region11: #{tpu_custom_call.1} parent=1 // pred_check_branch
      %18 = sbr.rel (0) target = $region13
    $region12: #{tpu_custom_call.1} parent=1 // pred_region
      _
    $region13: #{tpu_custom_call.1} parent=1 // pred_fallthru
      _
    // Predicated region
    $region14: #{tpu_custom_call.1} parent=1 // pred_check
      _
    $region15: #{tpu_custom_call.1} parent=1 // pred_check_branch
      %20 = sbr.rel (0) target = $region17
    $region16: #{tpu_custom_call.1} parent=1 // pred_region
      _
    $region17: #{tpu_custom_call.1} parent=1 // pred_fallthru
      _
    // Predicated region
    $region18: #{tpu_custom_call.1} parent=1 // pred_check
      _
    $region19: #{tpu_custom_call.1} parent=1 // pred_check_branch
      %22 = sbr.rel (0) target = $region21
    $region20: #{tpu_custom_call.1} parent=1 // pred_region
      _
    $region21: #{tpu_custom_call.1} parent=1 // pred_fallthru
      _
    // Predicated region
    $region22: #{tpu_custom_call.1} parent=1 // pred_check
      _
    $region23: #{tpu_custom_call.1} parent=1 // pred_check_branch
      %24 = sbr.rel (0) target = $region25
    $region24: #{tpu_custom_call.1} parent=1 // pred_region
      _
    $region25: #{tpu_custom_call.1} parent=1 // pred_fallthru
      _
    // Predicated region
    $region26: #{tpu_custom_call.1} parent=1 // pred_check
      _
    $region27: #{tpu_custom_call.1} parent=1 // pred_check_branch
      %26 = sbr.rel (0) target = $region29
    $region28: #{tpu_custom_call.1} parent=1 // pred_region
      _
    $region29: #{tpu_custom_call.1} parent=1 // pred_fallthru
      _
    %v27 = vld [vmem:[%s3] sm:$0xff]
    %v28 = vld [vmem:[%s3 + $0x8] sm:$0xff]
    %v29 = vld [vmem:[%s3 + $0x10] sm:$0xff]
    %v30 = vld [vmem:[%s3 + $0x18] sm:$0xff]
    %v31 = vld [vmem:[%s3 + $0x20] sm:$0xff]
    %v32 = vld [vmem:[%s3 + $0x28] sm:$0xff]
    %v33 = vld [vmem:[%s3 + $0x30] sm:$0xff]
    %v34 = vld [vmem:[%s3 + $0x38] sm:$0xff]
    %v35 = vld [vmem:[%s3 + $0x40] sm:$0xff]
    %v36 = vld [vmem:[%s3 + $0x48] sm:$0xff]
    %v37 = vld [vmem:[%s3 + $0x50] sm:$0xff]
    %v38 = vld [vmem:[%s3 + $0x58] sm:$0xff]
    %v39 = vld [vmem:[%s3 + $0x60] sm:$0xff]
    %v40 = vld [vmem:[%s3 + $0x68] sm:$0xff]
    %v41 = vld [vmem:[%s3 + $0x70] sm:$0xff]
    %v42 = vld [vmem:[%s3 + $0x78] sm:$0xff]
    %v43 = vmul.f32 %v35, %v39
    %v44 = vmul.f32 %v36, %v40
    %v45 = vmul.f32 %v37, %v41
    %v46 = vmul.f32 %v38, %v42
    %v47 = vld [vmem:[%s4] sm:$0xff]
    %v48 = vld [vmem:[%s4 + $0x8] sm:$0xff]
    %v49 = vld [vmem:[%s4 + $0x10] sm:$0xff]
    %v50 = vld [vmem:[%s4 + $0x18] sm:$0xff]
    %v51 = vld [vmem:[%s5] sm:$0x7]
    %v53 = vrot.slane %v51, 1
    %v55 = vmul.f32 %v51, %v53
    %v56 = vld [vmem:[%s6] sm:$0x3]
    %v57 = vld [vmem:[%s2] sm:$0x3]
    %v58 = vld [vmem:[%s0] sm:$0x3]
    %v59 = vld [vmem:[%s1] sm:$0x3]
    %v60 = vperm.slane %v56, 0
    %v61 = vmul.f32 %v58, %v60
    %v62 = vperm.slane %v56, 1
    %v63 = vadd.f32 %v61, %v62
    %v64 = vperm.slane %v63, 0
    %v65 = vlaneseq
    %v66 = vshrl.u32 %v65, 7
    %68 = vset.pattern.permute.xlu0 %v66
    %69 = vperm.xlu0 %68, %v64
    %v70 = vpop.permute.xlu0 %69
    %v71 = vperm.slane %v63, 1
    %v72 = vlaneseq
    %v73 = vshrl.u32 %v72, 7
    %75 = vset.pattern.permute.xlu0 %v73
    %76 = vperm.xlu0 %75, %v71
    %v77 = vpop.permute.xlu0 %76
    %v78 = vsub.f32 %v70, %v48
    %v79 = vsub.f32 %v77, %v48
    %v80 = vmul.f32 %v78, %v47
    %v81 = vmul.f32 %v79, %v47
    %v82 = vxor.u32 %v80, 2147483648
    %v83 = vxor.u32 %v81, 2147483648
    %v84 = vmul.f32 %v82, 1.442695
    %v85 = vpow.pop %v84
    %v86 = vmul.f32 %v83, 1.442695
    %v87 = vpow.pop %v86
    %v88 = vadd.f32 %v85, 1.0
    %v89 = vadd.f32 %v87, 1.0
    %v90 = vrcp.pop %v88
    %v91 = vmul.f32 %v88, %v90
    %v92 = vsub.f32 1.0, %v91
    %v93 = vmul.f32 %v90, %v92
    %v94 = vadd.f32 %v90, %v93
    %vm95 = vweird.f32 %v88
    %vm96 = vweird.f32 %v90
    %vm97 = vmor %vm95, %vm96
    %v98 = vsel %vm97, %v90, %v94
    %v99 = vand.u32 2147483647, %v88
    %vm100 = vcmp.eq.f32.partialorder %v99, 8.507059e+37
    %v101 = vand.u32 %v88, 2147483648
    %v102 = vor.u32 1.1754944e-38, %v101
    %v103 = vsel %vm100, %v102, %v98
    %v104 = vmul.f32 1.0, %v103
    %v105 = vrcp.pop %v89
    %v106 = vmul.f32 %v89, %v105
    %v107 = vsub.f32 1.0, %v106
    %v108 = vmul.f32 %v105, %v107
    %v109 = vadd.f32 %v105, %v108
    %vm110 = vweird.f32 %v89
    %vm111 = vweird.f32 %v105
    %vm112 = vmor %vm110, %vm111
    %v113 = vsel %vm112, %v105, %v109
    %v114 = vand.u32 2147483647, %v89
    %vm115 = vcmp.eq.f32.partialorder %v114, 8.507059e+37
    %v116 = vand.u32 %v89, 2147483648
    %v117 = vor.u32 1.1754944e-38, %v116
    %v118 = vsel %vm115, %v117, %v113
    %v119 = vmul.f32 1.0, %v118
    %v120 = vmul.f32 %v49, %v104
    %v121 = vmul.f32 %v49, %v119
    %v122 = vmul.f32 %v120, %v50
    %v123 = vmul.f32 %v121, %v50
    %vm124 = vcmask 261120
    %v125 = vsel %vm124, %v122, 0.0
    %v126 = vrot.slane %v125, 4
    %v127 = vadd.f32 %v125, %v126
    %v128 = vrot.slane %v127, 2
    %v129 = vadd.f32 %v127, %v128
    %v130 = vrot.slane %v129, 1
    %v131 = vadd.f32 %v129, %v130
    %v132 = vsel %vm124, %v123, 0.0
    %v133 = vrot.slane %v132, 4
    %v134 = vadd.f32 %v132, %v133
    %v135 = vrot.slane %v134, 2
    %v136 = vadd.f32 %v134, %v135
    %v137 = vrot.slane %v136, 1
    %v138 = vadd.f32 %v136, %v137
    %v139 = vsel %vm124, %v120, 0.0
    %v140 = vrot.slane %v139, 4
    %v141 = vadd.f32 %v139, %v140
    %v142 = vrot.slane %v141, 2
    %v143 = vadd.f32 %v141, %v142
    %v144 = vrot.slane %v143, 1
    %v145 = vadd.f32 %v143, %v144
    %v146 = vsel %vm124, %v121, 0.0
    %v147 = vrot.slane %v146, 4
    %v148 = vadd.f32 %v146, %v147
    %v149 = vrot.slane %v148, 2
    %v150 = vadd.f32 %v148, %v149
    %v151 = vrot.slane %v150, 1
    %v152 = vadd.f32 %v150, %v151
    %v153 = vadd.f32 %v59, 1.0
    %v154 = vrcp.pop %v153
    %v155 = vmul.f32 %v153, %v154
    %v156 = vsub.f32 2.0, %v155
    %v157 = vmul.f32 %v154, %v156
    %v158 = vmul.f32 %v157, 6.0
    %v159 = vperm.slane %v51, 2
    %161 = vset.pattern.permute.xlu0 0
    %162 = vperm.xlu0 %161, %v158
    %v163 = vpop.permute.xlu0 %162
    %v165 = vmul.f32 %v159, %v163
    %v166 = vperm.slane %v55, 0
    %vm169 = vcmask 1041409
    %v170 = vsel %vm169, %v138, %v131
    %v172 = vadd.f32 %v166, %v170
    %v173 = vperm.slane %v51, 0
    %v174 = vadd.f32 %v165, %v173
    %v177 = vsel %vm169, %v152, %v145
    %v179 = vadd.f32 %v174, %v177
    %v181 = vrot.slane %v57, 1
    %v182 = vperm.slane %v57, 0
    %v183 = vperm.slane %v181, 0
    %v186 = vsub.f32 %v182, %v31
    %v187 = vsub.f32 %v182, %v32
    %v188 = vsub.f32 %v182, %v33
    %v189 = vsub.f32 %v182, %v34
    %v190 = vsub.f32 %v183, %v31
    %v191 = vsub.f32 %v183, %v32
    %v192 = vsub.f32 %v183, %v33
    %v193 = vsub.f32 %v183, %v34
    %v194 = vmul.f32 %v186, %v27
    %v195 = vmul.f32 %v187, %v28
    %v196 = vmul.f32 %v188, %v29
    %v197 = vmul.f32 %v189, %v30
    %v198 = vmul.f32 %v190, %v27
    %v199 = vmul.f32 %v191, %v28
    %v200 = vmul.f32 %v192, %v29
    %v201 = vmul.f32 %v193, %v30
    %v202 = vxor.u32 %v194, 2147483648
    %v203 = vxor.u32 %v195, 2147483648
    %v204 = vxor.u32 %v196, 2147483648
    %v205 = vxor.u32 %v197, 2147483648
    %v206 = vxor.u32 %v198, 2147483648
    %v207 = vxor.u32 %v199, 2147483648
    %v208 = vxor.u32 %v200, 2147483648
    %v209 = vxor.u32 %v201, 2147483648
    %v210 = vmul.f32 %v202, 1.442695
    %v211 = vpow.pop %v210
    %v212 = vmul.f32 %v203, 1.442695
    %v213 = vpow.pop %v212
    %v214 = vmul.f32 %v204, 1.442695
    %v215 = vpow.pop %v214
    %v216 = vmul.f32 %v205, 1.442695
    %v217 = vpow.pop %v216
    %v218 = vmul.f32 %v206, 1.442695
    %v219 = vpow.pop %v218
    %v220 = vmul.f32 %v207, 1.442695
    %v221 = vpow.pop %v220
    %v222 = vmul.f32 %v208, 1.442695
    %v223 = vpow.pop %v222
    %v224 = vmul.f32 %v209, 1.442695
    %v225 = vpow.pop %v224
    %v226 = vadd.f32 %v211, 1.0
    %v227 = vadd.f32 %v213, 1.0
    %v228 = vadd.f32 %v215, 1.0
    %v229 = vadd.f32 %v217, 1.0
    %v230 = vadd.f32 %v219, 1.0
    %v231 = vadd.f32 %v221, 1.0
    %v232 = vadd.f32 %v223, 1.0
    %v233 = vadd.f32 %v225, 1.0
    %v234 = vrcp.pop %v226
    %v235 = vmul.f32 %v226, %v234
    %v236 = vsub.f32 1.0, %v235
    %v237 = vmul.f32 %v234, %v236
    %v238 = vadd.f32 %v234, %v237
    %vm239 = vweird.f32 %v226
    %vm240 = vweird.f32 %v234
    %vm241 = vmor %vm239, %vm240
    %v242 = vsel %vm241, %v234, %v238
    %v243 = vand.u32 2147483647, %v226
    %vm244 = vcmp.eq.f32.partialorder %v243, 8.507059e+37
    %v245 = vand.u32 %v226, 2147483648
    %v246 = vor.u32 1.1754944e-38, %v245
    %v247 = vsel %vm244, %v246, %v242
    %v248 = vmul.f32 1.0, %v247
    %v249 = vrcp.pop %v227
    %v250 = vmul.f32 %v227, %v249
    %v251 = vsub.f32 1.0, %v250
    %v252 = vmul.f32 %v249, %v251
    %v253 = vadd.f32 %v249, %v252
    %vm254 = vweird.f32 %v227
    %vm255 = vweird.f32 %v249
    %vm256 = vmor %vm254, %vm255
    %v257 = vsel %vm256, %v249, %v253
    %v258 = vand.u32 2147483647, %v227
    %vm259 = vcmp.eq.f32.partialorder %v258, 8.507059e+37
    %v260 = vand.u32 %v227, 2147483648
    %v261 = vor.u32 1.1754944e-38, %v260
    %v262 = vsel %vm259, %v261, %v257
    %v263 = vmul.f32 1.0, %v262
    %v264 = vrcp.pop %v228
    %v265 = vmul.f32 %v228, %v264
    %v266 = vsub.f32 1.0, %v265
    %v267 = vmul.f32 %v264, %v266
    %v268 = vadd.f32 %v264, %v267
    %vm269 = vweird.f32 %v228
    %vm270 = vweird.f32 %v264
    %vm271 = vmor %vm269, %vm270
    %v272 = vsel %vm271, %v264, %v268
    %v273 = vand.u32 2147483647, %v228
    %vm274 = vcmp.eq.f32.partialorder %v273, 8.507059e+37
    %v275 = vand.u32 %v228, 2147483648
    %v276 = vor.u32 1.1754944e-38, %v275
    %v277 = vsel %vm274, %v276, %v272
    %v278 = vmul.f32 1.0, %v277
    %v279 = vrcp.pop %v229
    %v280 = vmul.f32 %v229, %v279
    %v281 = vsub.f32 1.0, %v280
    %v282 = vmul.f32 %v279, %v281
    %v283 = vadd.f32 %v279, %v282
    %vm284 = vweird.f32 %v229
    %vm285 = vweird.f32 %v279
    %vm286 = vmor %vm284, %vm285
    %v287 = vsel %vm286, %v279, %v283
    %v288 = vand.u32 2147483647, %v229
    %vm289 = vcmp.eq.f32.partialorder %v288, 8.507059e+37
    %v290 = vand.u32 %v229, 2147483648
    %v291 = vor.u32 1.1754944e-38, %v290
    %v292 = vsel %vm289, %v291, %v287
    %v293 = vmul.f32 1.0, %v292
    %v294 = vrcp.pop %v230
    %v295 = vmul.f32 %v230, %v294
    %v296 = vsub.f32 1.0, %v295
    %v297 = vmul.f32 %v294, %v296
    %v298 = vadd.f32 %v294, %v297
    %vm299 = vweird.f32 %v230
    %vm300 = vweird.f32 %v294
    %vm301 = vmor %vm299, %vm300
    %v302 = vsel %vm301, %v294, %v298
    %v303 = vand.u32 2147483647, %v230
    %vm304 = vcmp.eq.f32.partialorder %v303, 8.507059e+37
    %v305 = vand.u32 %v230, 2147483648
    %v306 = vor.u32 1.1754944e-38, %v305
    %v307 = vsel %vm304, %v306, %v302
    %v308 = vmul.f32 1.0, %v307
    %v309 = vrcp.pop %v231
    %v310 = vmul.f32 %v231, %v309
    %v311 = vsub.f32 1.0, %v310
    %v312 = vmul.f32 %v309, %v311
    %v313 = vadd.f32 %v309, %v312
    %vm314 = vweird.f32 %v231
    %vm315 = vweird.f32 %v309
    %vm316 = vmor %vm314, %vm315
    %v317 = vsel %vm316, %v309, %v313
    %v318 = vand.u32 2147483647, %v231
    %vm319 = vcmp.eq.f32.partialorder %v318, 8.507059e+37
    %v320 = vand.u32 %v231, 2147483648
    %v321 = vor.u32 1.1754944e-38, %v320
    %v322 = vsel %vm319, %v321, %v317
    %v323 = vmul.f32 1.0, %v322
    %v324 = vrcp.pop %v232
    %v325 = vmul.f32 %v232, %v324
    %v326 = vsub.f32 1.0, %v325
    %v327 = vmul.f32 %v324, %v326
    %v328 = vadd.f32 %v324, %v327
    %vm329 = vweird.f32 %v232
    %vm330 = vweird.f32 %v324
    %vm331 = vmor %vm329, %vm330
    %v332 = vsel %vm331, %v324, %v328
    %v333 = vand.u32 2147483647, %v232
    %vm334 = vcmp.eq.f32.partialorder %v333, 8.507059e+37
    %v335 = vand.u32 %v232, 2147483648
    %v336 = vor.u32 1.1754944e-38, %v335
    %v337 = vsel %vm334, %v336, %v332
    %v338 = vmul.f32 1.0, %v337
    %v339 = vrcp.pop %v233
    %v340 = vmul.f32 %v233, %v339
    %v341 = vsub.f32 1.0, %v340
    %v342 = vmul.f32 %v339, %v341
    %v343 = vadd.f32 %v339, %v342
    %vm344 = vweird.f32 %v233
    %vm345 = vweird.f32 %v339
    %vm346 = vmor %vm344, %vm345
    %v347 = vsel %vm346, %v339, %v343
    %v348 = vand.u32 2147483647, %v233
    %vm349 = vcmp.eq.f32.partialorder %v348, 8.507059e+37
    %v350 = vand.u32 %v233, 2147483648
    %v351 = vor.u32 1.1754944e-38, %v350
    %v352 = vsel %vm349, %v351, %v347
    %v353 = vmul.f32 1.0, %v352
    %v354 = vmul.f32 %v43, %v248
    %v355 = vmul.f32 %v44, %v263
    %v356 = vmul.f32 %v45, %v278
    %v357 = vmul.f32 %v46, %v293
    %v358 = vmul.f32 %v43, %v308
    %v359 = vmul.f32 %v44, %v323
    %v360 = vmul.f32 %v45, %v338
    %v361 = vmul.f32 %v46, %v353
    %v362 = vsel %vm124, %v354, 0.0
    %363 = vadd.xlane.f32.xlu0 %v362
    %v364 = vpop.xlane.xlu0 %363
    %v365 = vsel %vm124, %v355, 0.0
    %366 = vadd.xlane.f32.xlu0 %v365
    %v367 = vpop.xlane.xlu0 %366
    %v368 = vsel %vm124, %v356, 0.0
    %369 = vadd.xlane.f32.xlu0 %v368
    %v370 = vpop.xlane.xlu0 %369
    %v371 = vsel %vm124, %v357, 0.0
    %372 = vadd.xlane.f32.xlu0 %v371
    %v373 = vpop.xlane.xlu0 %372
    %v374 = vsel %vm124, %v358, 0.0
    %375 = vadd.xlane.f32.xlu0 %v374
    %v376 = vpop.xlane.xlu0 %375
    %v377 = vsel %vm124, %v359, 0.0
    %378 = vadd.xlane.f32.xlu0 %v377
    %v379 = vpop.xlane.xlu0 %378
    %v380 = vsel %vm124, %v360, 0.0
    %381 = vadd.xlane.f32.xlu0 %v380
    %v382 = vpop.xlane.xlu0 %381
    %v383 = vsel %vm124, %v361, 0.0
    %384 = vadd.xlane.f32.xlu0 %v383
    %v385 = vpop.xlane.xlu0 %384
    %v386 = vmul.f32 %v35, %v248
    %v387 = vmul.f32 %v36, %v263
    %v388 = vmul.f32 %v37, %v278
    %v389 = vmul.f32 %v38, %v293
    %v390 = vmul.f32 %v35, %v308
    %v391 = vmul.f32 %v36, %v323
    %v392 = vmul.f32 %v37, %v338
    %v393 = vmul.f32 %v38, %v353
    %v394 = vsel %vm124, %v386, 0.0
    %395 = vadd.xlane.f32.xlu0 %v394
    %v396 = vpop.xlane.xlu0 %395
    %v397 = vsel %vm124, %v387, 0.0
    %398 = vadd.xlane.f32.xlu0 %v397
    %v399 = vpop.xlane.xlu0 %398
    %v400 = vsel %vm124, %v388, 0.0
    %401 = vadd.xlane.f32.xlu0 %v400
    %v402 = vpop.xlane.xlu0 %401
    %v403 = vsel %vm124, %v389, 0.0
    %404 = vadd.xlane.f32.xlu0 %v403
    %v405 = vpop.xlane.xlu0 %404
    %v406 = vsel %vm124, %v390, 0.0
    %407 = vadd.xlane.f32.xlu0 %v406
    %v408 = vpop.xlane.xlu0 %407
    %v409 = vsel %vm124, %v391, 0.0
    %410 = vadd.xlane.f32.xlu0 %v409
    %v411 = vpop.xlane.xlu0 %410
    %v412 = vsel %vm124, %v392, 0.0
    %413 = vadd.xlane.f32.xlu0 %v412
    %v414 = vpop.xlane.xlu0 %413
    %v415 = vsel %vm124, %v393, 0.0
    %416 = vadd.xlane.f32.xlu0 %v415
    %v417 = vpop.xlane.xlu0 %416
    %v418 = vmul.f32 %v165, %v57
    %v419 = vadd.f32 %v418, %v172
    %v428 = vlaneseq
    %v429 = vand.u32 %v428, 127
    %v430 = vperm.slane %v364, %v429
    %v431 = vadd.s32 %v429, 4294967288
    %v432 = vperm.slane %v367, %v431
    %vm433 = vcmask 130112
    %v434 = vsel %vm433, %v432, %v430
    %v435 = vadd.s32 %v429, 4294967280
    %v436 = vperm.slane %v370, %v435
    %vm437 = vcmask 195712
    %v438 = vsel %vm437, %v436, %v434
    %v439 = vadd.s32 %v429, 4294967272
    %v440 = vperm.slane %v373, %v439
    %vm441 = vcmask 261312
    %v442 = vsel %vm441, %v440, %v438
    %v443 = vperm.slane %v376, %v429
    %v444 = vperm.slane %v379, %v431
    %v445 = vsel %vm433, %v444, %v443
    %v446 = vperm.slane %v382, %v435
    %v447 = vsel %vm437, %v446, %v445
    %v448 = vperm.slane %v385, %v439
    %v449 = vsel %vm441, %v448, %v447
    %v450 = vsel %vm169, %v449, %v442
    %v452 = vadd.f32 %v419, %v450
    %v461 = vperm.slane %v396, %v429
    %v462 = vperm.slane %v399, %v431
    %v463 = vsel %vm433, %v462, %v461
    %v464 = vperm.slane %v402, %v435
    %v465 = vsel %vm437, %v464, %v463
    %v466 = vperm.slane %v405, %v439
    %v467 = vsel %vm441, %v466, %v465
    %v468 = vperm.slane %v408, %v429
    %v469 = vperm.slane %v411, %v431
    %v470 = vsel %vm433, %v469, %v468
    %v471 = vperm.slane %v414, %v435
    %v472 = vsel %vm437, %v471, %v470
    %v473 = vperm.slane %v417, %v439
    %v474 = vsel %vm441, %v473, %v472
    %v475 = vsel %vm169, %v474, %v467
    %v477 = vadd.f32 %v179, %v475
    %v478 = vadd.f32 %v477, 1e-08
    %v479 = vrcp.pop %v478
    %v480 = vmul.f32 %v478, %v479
    %v481 = vsub.f32 2.0, %v480
    %v482 = vmul.f32 %v479, %v481
    %v483 = vmul.f32 %v452, %v482
    %v485 = vrot.slane %v483, 1
    %v486 = vperm.slane %v483, 0
    %v487 = vperm.slane %v485, 0
    %v490 = vsub.f32 %v486, %v31
    %v491 = vsub.f32 %v486, %v32
    %v492 = vsub.f32 %v486, %v33
    %v493 = vsub.f32 %v486, %v34
    %v494 = vsub.f32 %v487, %v31
    %v495 = vsub.f32 %v487, %v32
    %v496 = vsub.f32 %v487, %v33
    %v497 = vsub.f32 %v487, %v34
    %v498 = vmul.f32 %v490, %v27
    %v499 = vmul.f32 %v491, %v28
    %v500 = vmul.f32 %v492, %v29
    %v501 = vmul.f32 %v493, %v30
    %v502 = vmul.f32 %v494, %v27
    %v503 = vmul.f32 %v495, %v28
    %v504 = vmul.f32 %v496, %v29
    %v505 = vmul.f32 %v497, %v30
    %v506 = vxor.u32 %v498, 2147483648
    %v507 = vxor.u32 %v499, 2147483648
    %v508 = vxor.u32 %v500, 2147483648
    %v509 = vxor.u32 %v501, 2147483648
    %v510 = vxor.u32 %v502, 2147483648
    %v511 = vxor.u32 %v503, 2147483648
    %v512 = vxor.u32 %v504, 2147483648
    %v513 = vxor.u32 %v505, 2147483648
    %v514 = vmul.f32 %v506, 1.442695
    %v515 = vpow.pop %v514
    %v516 = vmul.f32 %v507, 1.442695
    %v517 = vpow.pop %v516
    %v518 = vmul.f32 %v508, 1.442695
    %v519 = vpow.pop %v518
    %v520 = vmul.f32 %v509, 1.442695
    %v521 = vpow.pop %v520
    %v522 = vmul.f32 %v510, 1.442695
    %v523 = vpow.pop %v522
    %v524 = vmul.f32 %v511, 1.442695
    %v525 = vpow.pop %v524
    %v526 = vmul.f32 %v512, 1.442695
    %v527 = vpow.pop %v526
    %v528 = vmul.f32 %v513, 1.442695
    %v529 = vpow.pop %v528
    %v530 = vadd.f32 %v515, 1.0
    %v531 = vadd.f32 %v517, 1.0
    %v532 = vadd.f32 %v519, 1.0
    %v533 = vadd.f32 %v521, 1.0
    %v534 = vadd.f32 %v523, 1.0
    %v535 = vadd.f32 %v525, 1.0
    %v536 = vadd.f32 %v527, 1.0
    %v537 = vadd.f32 %v529, 1.0
    %v538 = vrcp.pop %v530
    %v539 = vmul.f32 %v530, %v538
    %v540 = vsub.f32 1.0, %v539
    %v541 = vmul.f32 %v538, %v540
    %v542 = vadd.f32 %v538, %v541
    %vm543 = vweird.f32 %v530
    %vm544 = vweird.f32 %v538
    %vm545 = vmor %vm543, %vm544
    %v546 = vsel %vm545, %v538, %v542
    %v547 = vand.u32 2147483647, %v530
    %vm548 = vcmp.eq.f32.partialorder %v547, 8.507059e+37
    %v549 = vand.u32 %v530, 2147483648
    %v550 = vor.u32 1.1754944e-38, %v549
    %v551 = vsel %vm548, %v550, %v546
    %v552 = vmul.f32 1.0, %v551
    %v553 = vrcp.pop %v531
    %v554 = vmul.f32 %v531, %v553
    %v555 = vsub.f32 1.0, %v554
    %v556 = vmul.f32 %v553, %v555
    %v557 = vadd.f32 %v553, %v556
    %vm558 = vweird.f32 %v531
    %vm559 = vweird.f32 %v553
    %vm560 = vmor %vm558, %vm559
    %v561 = vsel %vm560, %v553, %v557
    %v562 = vand.u32 2147483647, %v531
    %vm563 = vcmp.eq.f32.partialorder %v562, 8.507059e+37
    %v564 = vand.u32 %v531, 2147483648
    %v565 = vor.u32 1.1754944e-38, %v564
    %v566 = vsel %vm563, %v565, %v561
    %v567 = vmul.f32 1.0, %v566
    %v568 = vrcp.pop %v532
    %v569 = vmul.f32 %v532, %v568
    %v570 = vsub.f32 1.0, %v569
    %v571 = vmul.f32 %v568, %v570
    %v572 = vadd.f32 %v568, %v571
    %vm573 = vweird.f32 %v532
    %vm574 = vweird.f32 %v568
    %vm575 = vmor %vm573, %vm574
    %v576 = vsel %vm575, %v568, %v572
    %v577 = vand.u32 2147483647, %v532
    %vm578 = vcmp.eq.f32.partialorder %v577, 8.507059e+37
    %v579 = vand.u32 %v532, 2147483648
    %v580 = vor.u32 1.1754944e-38, %v579
    %v581 = vsel %vm578, %v580, %v576
    %v582 = vmul.f32 1.0, %v581
    %v583 = vrcp.pop %v533
    %v584 = vmul.f32 %v533, %v583
    %v585 = vsub.f32 1.0, %v584
    %v586 = vmul.f32 %v583, %v585
    %v587 = vadd.f32 %v583, %v586
    %vm588 = vweird.f32 %v533
    %vm589 = vweird.f32 %v583
    %vm590 = vmor %vm588, %vm589
    %v591 = vsel %vm590, %v583, %v587
    %v592 = vand.u32 2147483647, %v533
    %vm593 = vcmp.eq.f32.partialorder %v592, 8.507059e+37
    %v594 = vand.u32 %v533, 2147483648
    %v595 = vor.u32 1.1754944e-38, %v594
    %v596 = vsel %vm593, %v595, %v591
    %v597 = vmul.f32 1.0, %v596
    %v598 = vrcp.pop %v534
    %v599 = vmul.f32 %v534, %v598
    %v600 = vsub.f32 1.0, %v599
    %v601 = vmul.f32 %v598, %v600
    %v602 = vadd.f32 %v598, %v601
    %vm603 = vweird.f32 %v534
    %vm604 = vweird.f32 %v598
    %vm605 = vmor %vm603, %vm604
    %v606 = vsel %vm605, %v598, %v602
    %v607 = vand.u32 2147483647, %v534
    %vm608 = vcmp.eq.f32.partialorder %v607, 8.507059e+37
    %v609 = vand.u32 %v534, 2147483648
    %v610 = vor.u32 1.1754944e-38, %v609
    %v611 = vsel %vm608, %v610, %v606
    %v612 = vmul.f32 1.0, %v611
    %v613 = vrcp.pop %v535
    %v614 = vmul.f32 %v535, %v613
    %v615 = vsub.f32 1.0, %v614
    %v616 = vmul.f32 %v613, %v615
    %v617 = vadd.f32 %v613, %v616
    %vm618 = vweird.f32 %v535
    %vm619 = vweird.f32 %v613
    %vm620 = vmor %vm618, %vm619
    %v621 = vsel %vm620, %v613, %v617
    %v622 = vand.u32 2147483647, %v535
    %vm623 = vcmp.eq.f32.partialorder %v622, 8.507059e+37
    %v624 = vand.u32 %v535, 2147483648
    %v625 = vor.u32 1.1754944e-38, %v624
    %v626 = vsel %vm623, %v625, %v621
    %v627 = vmul.f32 1.0, %v626
    %v628 = vrcp.pop %v536
    %v629 = vmul.f32 %v536, %v628
    %v630 = vsub.f32 1.0, %v629
    %v631 = vmul.f32 %v628, %v630
    %v632 = vadd.f32 %v628, %v631
    %vm633 = vweird.f32 %v536
    %vm634 = vweird.f32 %v628
    %vm635 = vmor %vm633, %vm634
    %v636 = vsel %vm635, %v628, %v632
    %v637 = vand.u32 2147483647, %v536
    %vm638 = vcmp.eq.f32.partialorder %v637, 8.507059e+37
    %v639 = vand.u32 %v536, 2147483648
    %v640 = vor.u32 1.1754944e-38, %v639
    %v641 = vsel %vm638, %v640, %v636
    %v642 = vmul.f32 1.0, %v641
    %v643 = vrcp.pop %v537
    %v644 = vmul.f32 %v537, %v643
    %v645 = vsub.f32 1.0, %v644
    %v646 = vmul.f32 %v643, %v645
    %v647 = vadd.f32 %v643, %v646
    %vm648 = vweird.f32 %v537
    %vm649 = vweird.f32 %v643
    %vm650 = vmor %vm648, %vm649
    %v651 = vsel %vm650, %v643, %v647
    %v652 = vand.u32 2147483647, %v537
    %vm653 = vcmp.eq.f32.partialorder %v652, 8.507059e+37
    %v654 = vand.u32 %v537, 2147483648
    %v655 = vor.u32 1.1754944e-38, %v654
    %v656 = vsel %vm653, %v655, %v651
    %v657 = vmul.f32 1.0, %v656
    %v658 = vmul.f32 %v43, %v552
    %v659 = vmul.f32 %v44, %v567
    %v660 = vmul.f32 %v45, %v582
    %v661 = vmul.f32 %v46, %v597
    %v662 = vmul.f32 %v43, %v612
    %v663 = vmul.f32 %v44, %v627
    %v664 = vmul.f32 %v45, %v642
    %v665 = vmul.f32 %v46, %v657
    %v666 = vsel %vm124, %v658, 0.0
    %667 = vadd.xlane.f32.xlu0 %v666
    %v668 = vpop.xlane.xlu0 %667
    %v669 = vsel %vm124, %v659, 0.0
    %670 = vadd.xlane.f32.xlu0 %v669
    %v671 = vpop.xlane.xlu0 %670
    %v672 = vsel %vm124, %v660, 0.0
    %673 = vadd.xlane.f32.xlu0 %v672
    %v674 = vpop.xlane.xlu0 %673
    %v675 = vsel %vm124, %v661, 0.0
    %676 = vadd.xlane.f32.xlu0 %v675
    %v677 = vpop.xlane.xlu0 %676
    %v678 = vsel %vm124, %v662, 0.0
    %679 = vadd.xlane.f32.xlu0 %v678
    %v680 = vpop.xlane.xlu0 %679
    %v681 = vsel %vm124, %v663, 0.0
    %682 = vadd.xlane.f32.xlu0 %v681
    %v683 = vpop.xlane.xlu0 %682
    %v684 = vsel %vm124, %v664, 0.0
    %685 = vadd.xlane.f32.xlu0 %v684
    %v686 = vpop.xlane.xlu0 %685
    %v687 = vsel %vm124, %v665, 0.0
    %688 = vadd.xlane.f32.xlu0 %v687
    %v689 = vpop.xlane.xlu0 %688
    %v690 = vmul.f32 %v35, %v552
    %v691 = vmul.f32 %v36, %v567
    %v692 = vmul.f32 %v37, %v582
    %v693 = vmul.f32 %v38, %v597
    %v694 = vmul.f32 %v35, %v612
    %v695 = vmul.f32 %v36, %v627
    %v696 = vmul.f32 %v37, %v642
    %v697 = vmul.f32 %v38, %v657
    %v698 = vsel %vm124, %v690, 0.0
    %699 = vadd.xlane.f32.xlu0 %v698
    %v700 = vpop.xlane.xlu0 %699
    %v701 = vsel %vm124, %v691, 0.0
    %702 = vadd.xlane.f32.xlu0 %v701
    %v703 = vpop.xlane.xlu0 %702
    %v704 = vsel %vm124, %v692, 0.0
    %705 = vadd.xlane.f32.xlu0 %v704
    %v706 = vpop.xlane.xlu0 %705
    %v707 = vsel %vm124, %v693, 0.0
    %708 = vadd.xlane.f32.xlu0 %v707
    %v709 = vpop.xlane.xlu0 %708
    %v710 = vsel %vm124, %v694, 0.0
    %711 = vadd.xlane.f32.xlu0 %v710
    %v712 = vpop.xlane.xlu0 %711
    %v713 = vsel %vm124, %v695, 0.0
    %714 = vadd.xlane.f32.xlu0 %v713
    %v715 = vpop.xlane.xlu0 %714
    %v716 = vsel %vm124, %v696, 0.0
    %717 = vadd.xlane.f32.xlu0 %v716
    %v718 = vpop.xlane.xlu0 %717
    %v719 = vsel %vm124, %v697, 0.0
    %720 = vadd.xlane.f32.xlu0 %v719
    %v721 = vpop.xlane.xlu0 %720
    %v722 = vmul.f32 %v165, %v483
    %v723 = vadd.f32 %v722, %v172
    %v732 = vperm.slane %v668, %v429
    %v733 = vperm.slane %v671, %v431
    %v734 = vsel %vm433, %v733, %v732
    %v735 = vperm.slane %v674, %v435
    %v736 = vsel %vm437, %v735, %v734
    %v737 = vperm.slane %v677, %v439
    %v738 = vsel %vm441, %v737, %v736
    %v739 = vperm.slane %v680, %v429
    %v740 = vperm.slane %v683, %v431
    %v741 = vsel %vm433, %v740, %v739
    %v742 = vperm.slane %v686, %v435
    %v743 = vsel %vm437, %v742, %v741
    %v744 = vperm.slane %v689, %v439
    %v745 = vsel %vm441, %v744, %v743
    %v746 = vsel %vm169, %v745, %v738
    %v748 = vadd.f32 %v723, %v746
    %v757 = vperm.slane %v700, %v429
    %v758 = vperm.slane %v703, %v431
    %v759 = vsel %vm433, %v758, %v757
    %v760 = vperm.slane %v706, %v435
    %v761 = vsel %vm437, %v760, %v759
    %v762 = vperm.slane %v709, %v439
    %v763 = vsel %vm441, %v762, %v761
    %v764 = vperm.slane %v712, %v429
    %v765 = vperm.slane %v715, %v431
    %v766 = vsel %vm433, %v765, %v764
    %v767 = vperm.slane %v718, %v435
    %v768 = vsel %vm437, %v767, %v766
    %v769 = vperm.slane %v721, %v439
    %v770 = vsel %vm441, %v769, %v768
    %v771 = vsel %vm169, %v770, %v763
    %v773 = vadd.f32 %v179, %v771
    %v774 = vadd.f32 %v773, 1e-08
    %v775 = vrcp.pop %v774
    %v776 = vmul.f32 %v774, %v775
    %v777 = vsub.f32 2.0, %v776
    %v778 = vmul.f32 %v775, %v777
    %v779 = vmul.f32 %v748, %v778
    %v781 = vrot.slane %v779, 1
    %v782 = vperm.slane %v779, 0
    %v783 = vperm.slane %v781, 0
    %v786 = vsub.f32 %v782, %v31
    %v787 = vsub.f32 %v782, %v32
    %v788 = vsub.f32 %v782, %v33
    %v789 = vsub.f32 %v782, %v34
    %v790 = vsub.f32 %v783, %v31
    %v791 = vsub.f32 %v783, %v32
    %v792 = vsub.f32 %v783, %v33
    %v793 = vsub.f32 %v783, %v34
    %v794 = vmul.f32 %v786, %v27
    %v795 = vmul.f32 %v787, %v28
    %v796 = vmul.f32 %v788, %v29
    %v797 = vmul.f32 %v789, %v30
    %v798 = vmul.f32 %v790, %v27
    %v799 = vmul.f32 %v791, %v28
    %v800 = vmul.f32 %v792, %v29
    %v801 = vmul.f32 %v793, %v30
    %v802 = vxor.u32 %v794, 2147483648
    %v803 = vxor.u32 %v795, 2147483648
    %v804 = vxor.u32 %v796, 2147483648
    %v805 = vxor.u32 %v797, 2147483648
    %v806 = vxor.u32 %v798, 2147483648
    %v807 = vxor.u32 %v799, 2147483648
    %v808 = vxor.u32 %v800, 2147483648
    %v809 = vxor.u32 %v801, 2147483648
    %v810 = vmul.f32 %v802, 1.442695
    %v811 = vpow.pop %v810
    %v812 = vmul.f32 %v803, 1.442695
    %v813 = vpow.pop %v812
    %v814 = vmul.f32 %v804, 1.442695
    %v815 = vpow.pop %v814
    %v816 = vmul.f32 %v805, 1.442695
    %v817 = vpow.pop %v816
    %v818 = vmul.f32 %v806, 1.442695
    %v819 = vpow.pop %v818
    %v820 = vmul.f32 %v807, 1.442695
    %v821 = vpow.pop %v820
    %v822 = vmul.f32 %v808, 1.442695
    %v823 = vpow.pop %v822
    %v824 = vmul.f32 %v809, 1.442695
    %v825 = vpow.pop %v824
    %v826 = vadd.f32 %v811, 1.0
    %v827 = vadd.f32 %v813, 1.0
    %v828 = vadd.f32 %v815, 1.0
    %v829 = vadd.f32 %v817, 1.0
    %v830 = vadd.f32 %v819, 1.0
    %v831 = vadd.f32 %v821, 1.0
    %v832 = vadd.f32 %v823, 1.0
    %v833 = vadd.f32 %v825, 1.0
    %v834 = vrcp.pop %v826
    %v835 = vmul.f32 %v826, %v834
    %v836 = vsub.f32 1.0, %v835
    %v837 = vmul.f32 %v834, %v836
    %v838 = vadd.f32 %v834, %v837
    %vm839 = vweird.f32 %v826
    %vm840 = vweird.f32 %v834
    %vm841 = vmor %vm839, %vm840
    %v842 = vsel %vm841, %v834, %v838
    %v843 = vand.u32 2147483647, %v826
    %vm844 = vcmp.eq.f32.partialorder %v843, 8.507059e+37
    %v845 = vand.u32 %v826, 2147483648
    %v846 = vor.u32 1.1754944e-38, %v845
    %v847 = vsel %vm844, %v846, %v842
    %v848 = vmul.f32 1.0, %v847
    %v849 = vrcp.pop %v827
    %v850 = vmul.f32 %v827, %v849
    %v851 = vsub.f32 1.0, %v850
    %v852 = vmul.f32 %v849, %v851
    %v853 = vadd.f32 %v849, %v852
    %vm854 = vweird.f32 %v827
    %vm855 = vweird.f32 %v849
    %vm856 = vmor %vm854, %vm855
    %v857 = vsel %vm856, %v849, %v853
    %v858 = vand.u32 2147483647, %v827
    %vm859 = vcmp.eq.f32.partialorder %v858, 8.507059e+37
    %v860 = vand.u32 %v827, 2147483648
    %v861 = vor.u32 1.1754944e-38, %v860
    %v862 = vsel %vm859, %v861, %v857
    %v863 = vmul.f32 1.0, %v862
    %v864 = vrcp.pop %v828
    %v865 = vmul.f32 %v828, %v864
    %v866 = vsub.f32 1.0, %v865
    %v867 = vmul.f32 %v864, %v866
    %v868 = vadd.f32 %v864, %v867
    %vm869 = vweird.f32 %v828
    %vm870 = vweird.f32 %v864
    %vm871 = vmor %vm869, %vm870
    %v872 = vsel %vm871, %v864, %v868
    %v873 = vand.u32 2147483647, %v828
    %vm874 = vcmp.eq.f32.partialorder %v873, 8.507059e+37
    %v875 = vand.u32 %v828, 2147483648
    %v876 = vor.u32 1.1754944e-38, %v875
    %v877 = vsel %vm874, %v876, %v872
    %v878 = vmul.f32 1.0, %v877
    %v879 = vrcp.pop %v829
    %v880 = vmul.f32 %v829, %v879
    %v881 = vsub.f32 1.0, %v880
    %v882 = vmul.f32 %v879, %v881
    %v883 = vadd.f32 %v879, %v882
    %vm884 = vweird.f32 %v829
    %vm885 = vweird.f32 %v879
    %vm886 = vmor %vm884, %vm885
    %v887 = vsel %vm886, %v879, %v883
    %v888 = vand.u32 2147483647, %v829
    %vm889 = vcmp.eq.f32.partialorder %v888, 8.507059e+37
    %v890 = vand.u32 %v829, 2147483648
    %v891 = vor.u32 1.1754944e-38, %v890
    %v892 = vsel %vm889, %v891, %v887
    %v893 = vmul.f32 1.0, %v892
    %v894 = vrcp.pop %v830
    %v895 = vmul.f32 %v830, %v894
    %v896 = vsub.f32 1.0, %v895
    %v897 = vmul.f32 %v894, %v896
    %v898 = vadd.f32 %v894, %v897
    %vm899 = vweird.f32 %v830
    %vm900 = vweird.f32 %v894
    %vm901 = vmor %vm899, %vm900
    %v902 = vsel %vm901, %v894, %v898
    %v903 = vand.u32 2147483647, %v830
    %vm904 = vcmp.eq.f32.partialorder %v903, 8.507059e+37
    %v905 = vand.u32 %v830, 2147483648
    %v906 = vor.u32 1.1754944e-38, %v905
    %v907 = vsel %vm904, %v906, %v902
    %v908 = vmul.f32 1.0, %v907
    %v909 = vrcp.pop %v831
    %v910 = vmul.f32 %v831, %v909
    %v911 = vsub.f32 1.0, %v910
    %v912 = vmul.f32 %v909, %v911
    %v913 = vadd.f32 %v909, %v912
    %vm914 = vweird.f32 %v831
    %vm915 = vweird.f32 %v909
    %vm916 = vmor %vm914, %vm915
    %v917 = vsel %vm916, %v909, %v913
    %v918 = vand.u32 2147483647, %v831
    %vm919 = vcmp.eq.f32.partialorder %v918, 8.507059e+37
    %v920 = vand.u32 %v831, 2147483648
    %v921 = vor.u32 1.1754944e-38, %v920
    %v922 = vsel %vm919, %v921, %v917
    %v923 = vmul.f32 1.0, %v922
    %v924 = vrcp.pop %v832
    %v925 = vmul.f32 %v832, %v924
    %v926 = vsub.f32 1.0, %v925
    %v927 = vmul.f32 %v924, %v926
    %v928 = vadd.f32 %v924, %v927
    %vm929 = vweird.f32 %v832
    %vm930 = vweird.f32 %v924
    %vm931 = vmor %vm929, %vm930
    %v932 = vsel %vm931, %v924, %v928
    %v933 = vand.u32 2147483647, %v832
    %vm934 = vcmp.eq.f32.partialorder %v933, 8.507059e+37
    %v935 = vand.u32 %v832, 2147483648
    %v936 = vor.u32 1.1754944e-38, %v935
    %v937 = vsel %vm934, %v936, %v932
    %v938 = vmul.f32 1.0, %v937
    %v939 = vrcp.pop %v833
    %v940 = vmul.f32 %v833, %v939
    %v941 = vsub.f32 1.0, %v940
    %v942 = vmul.f32 %v939, %v941
    %v943 = vadd.f32 %v939, %v942
    %vm944 = vweird.f32 %v833
    %vm945 = vweird.f32 %v939
    %vm946 = vmor %vm944, %vm945
    %v947 = vsel %vm946, %v939, %v943
    %v948 = vand.u32 2147483647, %v833
    %vm949 = vcmp.eq.f32.partialorder %v948, 8.507059e+37
    %v950 = vand.u32 %v833, 2147483648
    %v951 = vor.u32 1.1754944e-38, %v950
    %v952 = vsel %vm949, %v951, %v947
    %v953 = vmul.f32 1.0, %v952
    %v954 = vmul.f32 %v43, %v848
    %v955 = vmul.f32 %v44, %v863
    %v956 = vmul.f32 %v45, %v878
    %v957 = vmul.f32 %v46, %v893
    %v958 = vmul.f32 %v43, %v908
    %v959 = vmul.f32 %v44, %v923
    %v960 = vmul.f32 %v45, %v938
    %v961 = vmul.f32 %v46, %v953
    %v962 = vsel %vm124, %v954, 0.0
    %963 = vadd.xlane.f32.xlu0 %v962
    %v964 = vpop.xlane.xlu0 %963
    %v965 = vsel %vm124, %v955, 0.0
    %966 = vadd.xlane.f32.xlu0 %v965
    %v967 = vpop.xlane.xlu0 %966
    %v968 = vsel %vm124, %v956, 0.0
    %969 = vadd.xlane.f32.xlu0 %v968
    %v970 = vpop.xlane.xlu0 %969
    %v971 = vsel %vm124, %v957, 0.0
    %972 = vadd.xlane.f32.xlu0 %v971
    %v973 = vpop.xlane.xlu0 %972
    %v974 = vsel %vm124, %v958, 0.0
    %975 = vadd.xlane.f32.xlu0 %v974
    %v976 = vpop.xlane.xlu0 %975
    %v977 = vsel %vm124, %v959, 0.0
    %978 = vadd.xlane.f32.xlu0 %v977
    %v979 = vpop.xlane.xlu0 %978
    %v980 = vsel %vm124, %v960, 0.0
    %981 = vadd.xlane.f32.xlu0 %v980
    %v982 = vpop.xlane.xlu0 %981
    %v983 = vsel %vm124, %v961, 0.0
    %984 = vadd.xlane.f32.xlu0 %v983
    %v985 = vpop.xlane.xlu0 %984
    %v986 = vmul.f32 %v35, %v848
    %v987 = vmul.f32 %v36, %v863
    %v988 = vmul.f32 %v37, %v878
    %v989 = vmul.f32 %v38, %v893
    %v990 = vmul.f32 %v35, %v908
    %v991 = vmul.f32 %v36, %v923
    %v992 = vmul.f32 %v37, %v938
    %v993 = vmul.f32 %v38, %v953
    %v994 = vsel %vm124, %v986, 0.0
    %995 = vadd.xlane.f32.xlu0 %v994
    %v996 = vpop.xlane.xlu0 %995
    %v997 = vsel %vm124, %v987, 0.0
    %998 = vadd.xlane.f32.xlu0 %v997
    %v999 = vpop.xlane.xlu0 %998
    %v1000 = vsel %vm124, %v988, 0.0
    %1001 = vadd.xlane.f32.xlu0 %v1000
    %v1002 = vpop.xlane.xlu0 %1001
    %v1003 = vsel %vm124, %v989, 0.0
    %1004 = vadd.xlane.f32.xlu0 %v1003
    %v1005 = vpop.xlane.xlu0 %1004
    %v1006 = vsel %vm124, %v990, 0.0
    %1007 = vadd.xlane.f32.xlu0 %v1006
    %v1008 = vpop.xlane.xlu0 %1007
    %v1009 = vsel %vm124, %v991, 0.0
    %1010 = vadd.xlane.f32.xlu0 %v1009
    %v1011 = vpop.xlane.xlu0 %1010
    %v1012 = vsel %vm124, %v992, 0.0
    %1013 = vadd.xlane.f32.xlu0 %v1012
    %v1014 = vpop.xlane.xlu0 %1013
    %v1015 = vsel %vm124, %v993, 0.0
    %1016 = vadd.xlane.f32.xlu0 %v1015
    %v1017 = vpop.xlane.xlu0 %1016
    %v1018 = vmul.f32 %v165, %v779
    %v1019 = vadd.f32 %v1018, %v172
    %v1028 = vperm.slane %v964, %v429
    %v1029 = vperm.slane %v967, %v431
    %v1030 = vsel %vm433, %v1029, %v1028
    %v1031 = vperm.slane %v970, %v435
    %v1032 = vsel %vm437, %v1031, %v1030
    %v1033 = vperm.slane %v973, %v439
    %v1034 = vsel %vm441, %v1033, %v1032
    %v1035 = vperm.slane %v976, %v429
    %v1036 = vperm.slane %v979, %v431
    %v1037 = vsel %vm433, %v1036, %v1035
    %v1038 = vperm.slane %v982, %v435
    %v1039 = vsel %vm437, %v1038, %v1037
    %v1040 = vperm.slane %v985, %v439
    %v1041 = vsel %vm441, %v1040, %v1039
    %v1042 = vsel %vm169, %v1041, %v1034
    %v1044 = vadd.f32 %v1019, %v1042
    %v1053 = vperm.slane %v996, %v429
    %v1054 = vperm.slane %v999, %v431
    %v1055 = vsel %vm433, %v1054, %v1053
    %v1056 = vperm.slane %v1002, %v435
    %v1057 = vsel %vm437, %v1056, %v1055
    %v1058 = vperm.slane %v1005, %v439
    %v1059 = vsel %vm441, %v1058, %v1057
    %v1060 = vperm.slane %v1008, %v429
    %v1061 = vperm.slane %v1011, %v431
    %v1062 = vsel %vm433, %v1061, %v1060
    %v1063 = vperm.slane %v1014, %v435
    %v1064 = vsel %vm437, %v1063, %v1062
    %v1065 = vperm.slane %v1017, %v439
    %v1066 = vsel %vm441, %v1065, %v1064
    %v1067 = vsel %vm169, %v1066, %v1059
    %v1069 = vadd.f32 %v179, %v1067
    %v1070 = vadd.f32 %v1069, 1e-08
    %v1071 = vrcp.pop %v1070
    %v1072 = vmul.f32 %v1070, %v1071
    %v1073 = vsub.f32 2.0, %v1072
    %v1074 = vmul.f32 %v1071, %v1073
    %v1075 = vmul.f32 %v1044, %v1074
    %v1077 = vrot.slane %v1075, 1
    %v1078 = vperm.slane %v1075, 0
    %v1079 = vperm.slane %v1077, 0
    %v1082 = vsub.f32 %v1078, %v31
    %v1083 = vsub.f32 %v1078, %v32
    %v1084 = vsub.f32 %v1078, %v33
    %v1085 = vsub.f32 %v1078, %v34
    %v1086 = vsub.f32 %v1079, %v31
    %v1087 = vsub.f32 %v1079, %v32
    %v1088 = vsub.f32 %v1079, %v33
    %v1089 = vsub.f32 %v1079, %v34
    %v1090 = vmul.f32 %v1082, %v27
    %v1091 = vmul.f32 %v1083, %v28
    %v1092 = vmul.f32 %v1084, %v29
    %v1093 = vmul.f32 %v1085, %v30
    %v1094 = vmul.f32 %v1086, %v27
    %v1095 = vmul.f32 %v1087, %v28
    %v1096 = vmul.f32 %v1088, %v29
    %v1097 = vmul.f32 %v1089, %v30
    %v1098 = vxor.u32 %v1090, 2147483648
    %v1099 = vxor.u32 %v1091, 2147483648
    %v1100 = vxor.u32 %v1092, 2147483648
    %v1101 = vxor.u32 %v1093, 2147483648
    %v1102 = vxor.u32 %v1094, 2147483648
    %v1103 = vxor.u32 %v1095, 2147483648
    %v1104 = vxor.u32 %v1096, 2147483648
    %v1105 = vxor.u32 %v1097, 2147483648
    %v1106 = vmul.f32 %v1098, 1.442695
    %v1107 = vpow.pop %v1106
    %v1108 = vmul.f32 %v1099, 1.442695
    %v1109 = vpow.pop %v1108
    %v1110 = vmul.f32 %v1100, 1.442695
    %v1111 = vpow.pop %v1110
    %v1112 = vmul.f32 %v1101, 1.442695
    %v1113 = vpow.pop %v1112
    %v1114 = vmul.f32 %v1102, 1.442695
    %v1115 = vpow.pop %v1114
    %v1116 = vmul.f32 %v1103, 1.442695
    %v1117 = vpow.pop %v1116
    %v1118 = vmul.f32 %v1104, 1.442695
    %v1119 = vpow.pop %v1118
    %v1120 = vmul.f32 %v1105, 1.442695
    %v1121 = vpow.pop %v1120
    %v1122 = vadd.f32 %v1107, 1.0
    %v1123 = vadd.f32 %v1109, 1.0
    %v1124 = vadd.f32 %v1111, 1.0
    %v1125 = vadd.f32 %v1113, 1.0
    %v1126 = vadd.f32 %v1115, 1.0
    %v1127 = vadd.f32 %v1117, 1.0
    %v1128 = vadd.f32 %v1119, 1.0
    %v1129 = vadd.f32 %v1121, 1.0
    %v1130 = vrcp.pop %v1122
    %v1131 = vmul.f32 %v1122, %v1130
    %v1132 = vsub.f32 1.0, %v1131
    %v1133 = vmul.f32 %v1130, %v1132
    %v1134 = vadd.f32 %v1130, %v1133
    %vm1135 = vweird.f32 %v1122
    %vm1136 = vweird.f32 %v1130
    %vm1137 = vmor %vm1135, %vm1136
    %v1138 = vsel %vm1137, %v1130, %v1134
    %v1139 = vand.u32 2147483647, %v1122
    %vm1140 = vcmp.eq.f32.partialorder %v1139, 8.507059e+37
    %v1141 = vand.u32 %v1122, 2147483648
    %v1142 = vor.u32 1.1754944e-38, %v1141
    %v1143 = vsel %vm1140, %v1142, %v1138
    %v1144 = vmul.f32 1.0, %v1143
    %v1145 = vrcp.pop %v1123
    %v1146 = vmul.f32 %v1123, %v1145
    %v1147 = vsub.f32 1.0, %v1146
    %v1148 = vmul.f32 %v1145, %v1147
    %v1149 = vadd.f32 %v1145, %v1148
    %vm1150 = vweird.f32 %v1123
    %vm1151 = vweird.f32 %v1145
    %vm1152 = vmor %vm1150, %vm1151
    %v1153 = vsel %vm1152, %v1145, %v1149
    %v1154 = vand.u32 2147483647, %v1123
    %vm1155 = vcmp.eq.f32.partialorder %v1154, 8.507059e+37
    %v1156 = vand.u32 %v1123, 2147483648
    %v1157 = vor.u32 1.1754944e-38, %v1156
    %v1158 = vsel %vm1155, %v1157, %v1153
    %v1159 = vmul.f32 1.0, %v1158
    %v1160 = vrcp.pop %v1124
    %v1161 = vmul.f32 %v1124, %v1160
    %v1162 = vsub.f32 1.0, %v1161
    %v1163 = vmul.f32 %v1160, %v1162
    %v1164 = vadd.f32 %v1160, %v1163
    %vm1165 = vweird.f32 %v1124
    %vm1166 = vweird.f32 %v1160
    %vm1167 = vmor %vm1165, %vm1166
    %v1168 = vsel %vm1167, %v1160, %v1164
    %v1169 = vand.u32 2147483647, %v1124
    %vm1170 = vcmp.eq.f32.partialorder %v1169, 8.507059e+37
    %v1171 = vand.u32 %v1124, 2147483648
    %v1172 = vor.u32 1.1754944e-38, %v1171
    %v1173 = vsel %vm1170, %v1172, %v1168
    %v1174 = vmul.f32 1.0, %v1173
    %v1175 = vrcp.pop %v1125
    %v1176 = vmul.f32 %v1125, %v1175
    %v1177 = vsub.f32 1.0, %v1176
    %v1178 = vmul.f32 %v1175, %v1177
    %v1179 = vadd.f32 %v1175, %v1178
    %vm1180 = vweird.f32 %v1125
    %vm1181 = vweird.f32 %v1175
    %vm1182 = vmor %vm1180, %vm1181
    %v1183 = vsel %vm1182, %v1175, %v1179
    %v1184 = vand.u32 2147483647, %v1125
    %vm1185 = vcmp.eq.f32.partialorder %v1184, 8.507059e+37
    %v1186 = vand.u32 %v1125, 2147483648
    %v1187 = vor.u32 1.1754944e-38, %v1186
    %v1188 = vsel %vm1185, %v1187, %v1183
    %v1189 = vmul.f32 1.0, %v1188
    %v1190 = vrcp.pop %v1126
    %v1191 = vmul.f32 %v1126, %v1190
    %v1192 = vsub.f32 1.0, %v1191
    %v1193 = vmul.f32 %v1190, %v1192
    %v1194 = vadd.f32 %v1190, %v1193
    %vm1195 = vweird.f32 %v1126
    %vm1196 = vweird.f32 %v1190
    %vm1197 = vmor %vm1195, %vm1196
    %v1198 = vsel %vm1197, %v1190, %v1194
    %v1199 = vand.u32 2147483647, %v1126
    %vm1200 = vcmp.eq.f32.partialorder %v1199, 8.507059e+37
    %v1201 = vand.u32 %v1126, 2147483648
    %v1202 = vor.u32 1.1754944e-38, %v1201
    %v1203 = vsel %vm1200, %v1202, %v1198
    %v1204 = vmul.f32 1.0, %v1203
    %v1205 = vrcp.pop %v1127
    %v1206 = vmul.f32 %v1127, %v1205
    %v1207 = vsub.f32 1.0, %v1206
    %v1208 = vmul.f32 %v1205, %v1207
    %v1209 = vadd.f32 %v1205, %v1208
    %vm1210 = vweird.f32 %v1127
    %vm1211 = vweird.f32 %v1205
    %vm1212 = vmor %vm1210, %vm1211
    %v1213 = vsel %vm1212, %v1205, %v1209
    %v1214 = vand.u32 2147483647, %v1127
    %vm1215 = vcmp.eq.f32.partialorder %v1214, 8.507059e+37
    %v1216 = vand.u32 %v1127, 2147483648
    %v1217 = vor.u32 1.1754944e-38, %v1216
    %v1218 = vsel %vm1215, %v1217, %v1213
    %v1219 = vmul.f32 1.0, %v1218
    %v1220 = vrcp.pop %v1128
    %v1221 = vmul.f32 %v1128, %v1220
    %v1222 = vsub.f32 1.0, %v1221
    %v1223 = vmul.f32 %v1220, %v1222
    %v1224 = vadd.f32 %v1220, %v1223
    %vm1225 = vweird.f32 %v1128
    %vm1226 = vweird.f32 %v1220
    %vm1227 = vmor %vm1225, %vm1226
    %v1228 = vsel %vm1227, %v1220, %v1224
    %v1229 = vand.u32 2147483647, %v1128
    %vm1230 = vcmp.eq.f32.partialorder %v1229, 8.507059e+37
    %v1231 = vand.u32 %v1128, 2147483648
    %v1232 = vor.u32 1.1754944e-38, %v1231
    %v1233 = vsel %vm1230, %v1232, %v1228
    %v1234 = vmul.f32 1.0, %v1233
    %v1235 = vrcp.pop %v1129
    %v1236 = vmul.f32 %v1129, %v1235
    %v1237 = vsub.f32 1.0, %v1236
    %v1238 = vmul.f32 %v1235, %v1237
    %v1239 = vadd.f32 %v1235, %v1238
    %vm1240 = vweird.f32 %v1129
    %vm1241 = vweird.f32 %v1235
    %vm1242 = vmor %vm1240, %vm1241
    %v1243 = vsel %vm1242, %v1235, %v1239
    %v1244 = vand.u32 2147483647, %v1129
    %vm1245 = vcmp.eq.f32.partialorder %v1244, 8.507059e+37
    %v1246 = vand.u32 %v1129, 2147483648
    %v1247 = vor.u32 1.1754944e-38, %v1246
    %v1248 = vsel %vm1245, %v1247, %v1243
    %v1249 = vmul.f32 1.0, %v1248
    %v1250 = vmul.f32 %v43, %v1144
    %v1251 = vmul.f32 %v44, %v1159
    %v1252 = vmul.f32 %v45, %v1174
    %v1253 = vmul.f32 %v46, %v1189
    %v1254 = vmul.f32 %v43, %v1204
    %v1255 = vmul.f32 %v44, %v1219
    %v1256 = vmul.f32 %v45, %v1234
    %v1257 = vmul.f32 %v46, %v1249
    %v1258 = vsel %vm124, %v1250, 0.0
    %1259 = vadd.xlane.f32.xlu0 %v1258
    %v1260 = vpop.xlane.xlu0 %1259
    %v1261 = vsel %vm124, %v1251, 0.0
    %1262 = vadd.xlane.f32.xlu0 %v1261
    %v1263 = vpop.xlane.xlu0 %1262
    %v1264 = vsel %vm124, %v1252, 0.0
    %1265 = vadd.xlane.f32.xlu0 %v1264
    %v1266 = vpop.xlane.xlu0 %1265
    %v1267 = vsel %vm124, %v1253, 0.0
    %1268 = vadd.xlane.f32.xlu0 %v1267
    %v1269 = vpop.xlane.xlu0 %1268
    %v1270 = vsel %vm124, %v1254, 0.0
    %1271 = vadd.xlane.f32.xlu0 %v1270
    %v1272 = vpop.xlane.xlu0 %1271
    %v1273 = vsel %vm124, %v1255, 0.0
    %1274 = vadd.xlane.f32.xlu0 %v1273
    %v1275 = vpop.xlane.xlu0 %1274
    %v1276 = vsel %vm124, %v1256, 0.0
    %1277 = vadd.xlane.f32.xlu0 %v1276
    %v1278 = vpop.xlane.xlu0 %1277
    %v1279 = vsel %vm124, %v1257, 0.0
    %1280 = vadd.xlane.f32.xlu0 %v1279
    %v1281 = vpop.xlane.xlu0 %1280
    %v1282 = vmul.f32 %v35, %v1144
    %v1283 = vmul.f32 %v36, %v1159
    %v1284 = vmul.f32 %v37, %v1174
    %v1285 = vmul.f32 %v38, %v1189
    %v1286 = vmul.f32 %v35, %v1204
    %v1287 = vmul.f32 %v36, %v1219
    %v1288 = vmul.f32 %v37, %v1234
    %v1289 = vmul.f32 %v38, %v1249
    %v1290 = vsel %vm124, %v1282, 0.0
    %1291 = vadd.xlane.f32.xlu0 %v1290
    %v1292 = vpop.xlane.xlu0 %1291
    %v1293 = vsel %vm124, %v1283, 0.0
    %1294 = vadd.xlane.f32.xlu0 %v1293
    %v1295 = vpop.xlane.xlu0 %1294
    %v1296 = vsel %vm124, %v1284, 0.0
    %1297 = vadd.xlane.f32.xlu0 %v1296
    %v1298 = vpop.xlane.xlu0 %1297
    %v1299 = vsel %vm124, %v1285, 0.0
    %1300 = vadd.xlane.f32.xlu0 %v1299
    %v1301 = vpop.xlane.xlu0 %1300
    %v1302 = vsel %vm124, %v1286, 0.0
    %1303 = vadd.xlane.f32.xlu0 %v1302
    %v1304 = vpop.xlane.xlu0 %1303
    %v1305 = vsel %vm124, %v1287, 0.0
    %1306 = vadd.xlane.f32.xlu0 %v1305
    %v1307 = vpop.xlane.xlu0 %1306
    %v1308 = vsel %vm124, %v1288, 0.0
    %1309 = vadd.xlane.f32.xlu0 %v1308
    %v1310 = vpop.xlane.xlu0 %1309
    %v1311 = vsel %vm124, %v1289, 0.0
    %1312 = vadd.xlane.f32.xlu0 %v1311
    %v1313 = vpop.xlane.xlu0 %1312
    %v1314 = vmul.f32 %v165, %v1075
    %v1315 = vadd.f32 %v1314, %v172
    %v1324 = vperm.slane %v1260, %v429
    %v1325 = vperm.slane %v1263, %v431
    %v1326 = vsel %vm433, %v1325, %v1324
    %v1327 = vperm.slane %v1266, %v435
    %v1328 = vsel %vm437, %v1327, %v1326
    %v1329 = vperm.slane %v1269, %v439
    %v1330 = vsel %vm441, %v1329, %v1328
    %v1331 = vperm.slane %v1272, %v429
    %v1332 = vperm.slane %v1275, %v431
    %v1333 = vsel %vm433, %v1332, %v1331
    %v1334 = vperm.slane %v1278, %v435
    %v1335 = vsel %vm437, %v1334, %v1333
    %v1336 = vperm.slane %v1281, %v439
    %v1337 = vsel %vm441, %v1336, %v1335
    %v1338 = vsel %vm169, %v1337, %v1330
    %v1340 = vadd.f32 %v1315, %v1338
    %v1349 = vperm.slane %v1292, %v429
    %v1350 = vperm.slane %v1295, %v431
    %v1351 = vsel %vm433, %v1350, %v1349
    %v1352 = vperm.slane %v1298, %v435
    %v1353 = vsel %vm437, %v1352, %v1351
    %v1354 = vperm.slane %v1301, %v439
    %v1355 = vsel %vm441, %v1354, %v1353
    %v1356 = vperm.slane %v1304, %v429
    %v1357 = vperm.slane %v1307, %v431
    %v1358 = vsel %vm433, %v1357, %v1356
    %v1359 = vperm.slane %v1310, %v435
    %v1360 = vsel %vm437, %v1359, %v1358
    %v1361 = vperm.slane %v1313, %v439
    %v1362 = vsel %vm441, %v1361, %v1360
    %v1363 = vsel %vm169, %v1362, %v1355
    %v1365 = vadd.f32 %v179, %v1363
    %v1366 = vadd.f32 %v1365, 1e-08
    %v1367 = vrcp.pop %v1366
    %v1368 = vmul.f32 %v1366, %v1367
    %v1369 = vsub.f32 2.0, %v1368
    %v1370 = vmul.f32 %v1367, %v1369
    %v1371 = vmul.f32 %v1340, %v1370
    %v1373 = vrot.slane %v1371, 1
    %v1374 = vperm.slane %v1371, 0
    %v1375 = vperm.slane %v1373, 0
    %v1378 = vsub.f32 %v1374, %v31
    %v1379 = vsub.f32 %v1374, %v32
    %v1380 = vsub.f32 %v1374, %v33
    %v1381 = vsub.f32 %v1374, %v34
    %v1382 = vsub.f32 %v1375, %v31
    %v1383 = vsub.f32 %v1375, %v32
    %v1384 = vsub.f32 %v1375, %v33
    %v1385 = vsub.f32 %v1375, %v34
    %v1386 = vmul.f32 %v1378, %v27
    %v1387 = vmul.f32 %v1379, %v28
    %v1388 = vmul.f32 %v1380, %v29
    %v1389 = vmul.f32 %v1381, %v30
    %v1390 = vmul.f32 %v1382, %v27
    %v1391 = vmul.f32 %v1383, %v28
    %v1392 = vmul.f32 %v1384, %v29
    %v1393 = vmul.f32 %v1385, %v30
    %v1394 = vxor.u32 %v1386, 2147483648
    %v1395 = vxor.u32 %v1387, 2147483648
    %v1396 = vxor.u32 %v1388, 2147483648
    %v1397 = vxor.u32 %v1389, 2147483648
    %v1398 = vxor.u32 %v1390, 2147483648
    %v1399 = vxor.u32 %v1391, 2147483648
    %v1400 = vxor.u32 %v1392, 2147483648
    %v1401 = vxor.u32 %v1393, 2147483648
    %v1402 = vmul.f32 %v1394, 1.442695
    %v1403 = vpow.pop %v1402
    %v1404 = vmul.f32 %v1395, 1.442695
    %v1405 = vpow.pop %v1404
    %v1406 = vmul.f32 %v1396, 1.442695
    %v1407 = vpow.pop %v1406
    %v1408 = vmul.f32 %v1397, 1.442695
    %v1409 = vpow.pop %v1408
    %v1410 = vmul.f32 %v1398, 1.442695
    %v1411 = vpow.pop %v1410
    %v1412 = vmul.f32 %v1399, 1.442695
    %v1413 = vpow.pop %v1412
    %v1414 = vmul.f32 %v1400, 1.442695
    %v1415 = vpow.pop %v1414
    %v1416 = vmul.f32 %v1401, 1.442695
    %v1417 = vpow.pop %v1416
    %v1418 = vadd.f32 %v1403, 1.0
    %v1419 = vadd.f32 %v1405, 1.0
    %v1420 = vadd.f32 %v1407, 1.0
    %v1421 = vadd.f32 %v1409, 1.0
    %v1422 = vadd.f32 %v1411, 1.0
    %v1423 = vadd.f32 %v1413, 1.0
    %v1424 = vadd.f32 %v1415, 1.0
    %v1425 = vadd.f32 %v1417, 1.0
    %v1426 = vrcp.pop %v1418
    %v1427 = vmul.f32 %v1418, %v1426
    %v1428 = vsub.f32 1.0, %v1427
    %v1429 = vmul.f32 %v1426, %v1428
    %v1430 = vadd.f32 %v1426, %v1429
    %vm1431 = vweird.f32 %v1418
    %vm1432 = vweird.f32 %v1426
    %vm1433 = vmor %vm1431, %vm1432
    %v1434 = vsel %vm1433, %v1426, %v1430
    %v1435 = vand.u32 2147483647, %v1418
    %vm1436 = vcmp.eq.f32.partialorder %v1435, 8.507059e+37
    %v1437 = vand.u32 %v1418, 2147483648
    %v1438 = vor.u32 1.1754944e-38, %v1437
    %v1439 = vsel %vm1436, %v1438, %v1434
    %v1440 = vmul.f32 1.0, %v1439
    %v1441 = vrcp.pop %v1419
    %v1442 = vmul.f32 %v1419, %v1441
    %v1443 = vsub.f32 1.0, %v1442
    %v1444 = vmul.f32 %v1441, %v1443
    %v1445 = vadd.f32 %v1441, %v1444
    %vm1446 = vweird.f32 %v1419
    %vm1447 = vweird.f32 %v1441
    %vm1448 = vmor %vm1446, %vm1447
    %v1449 = vsel %vm1448, %v1441, %v1445
    %v1450 = vand.u32 2147483647, %v1419
    %vm1451 = vcmp.eq.f32.partialorder %v1450, 8.507059e+37
    %v1452 = vand.u32 %v1419, 2147483648
    %v1453 = vor.u32 1.1754944e-38, %v1452
    %v1454 = vsel %vm1451, %v1453, %v1449
    %v1455 = vmul.f32 1.0, %v1454
    %v1456 = vrcp.pop %v1420
    %v1457 = vmul.f32 %v1420, %v1456
    %v1458 = vsub.f32 1.0, %v1457
    %v1459 = vmul.f32 %v1456, %v1458
    %v1460 = vadd.f32 %v1456, %v1459
    %vm1461 = vweird.f32 %v1420
    %vm1462 = vweird.f32 %v1456
    %vm1463 = vmor %vm1461, %vm1462
    %v1464 = vsel %vm1463, %v1456, %v1460
    %v1465 = vand.u32 2147483647, %v1420
    %vm1466 = vcmp.eq.f32.partialorder %v1465, 8.507059e+37
    %v1467 = vand.u32 %v1420, 2147483648
    %v1468 = vor.u32 1.1754944e-38, %v1467
    %v1469 = vsel %vm1466, %v1468, %v1464
    %v1470 = vmul.f32 1.0, %v1469
    %v1471 = vrcp.pop %v1421
    %v1472 = vmul.f32 %v1421, %v1471
    %v1473 = vsub.f32 1.0, %v1472
    %v1474 = vmul.f32 %v1471, %v1473
    %v1475 = vadd.f32 %v1471, %v1474
    %vm1476 = vweird.f32 %v1421
    %vm1477 = vweird.f32 %v1471
    %vm1478 = vmor %vm1476, %vm1477
    %v1479 = vsel %vm1478, %v1471, %v1475
    %v1480 = vand.u32 2147483647, %v1421
    %vm1481 = vcmp.eq.f32.partialorder %v1480, 8.507059e+37
    %v1482 = vand.u32 %v1421, 2147483648
    %v1483 = vor.u32 1.1754944e-38, %v1482
    %v1484 = vsel %vm1481, %v1483, %v1479
    %v1485 = vmul.f32 1.0, %v1484
    %v1486 = vrcp.pop %v1422
    %v1487 = vmul.f32 %v1422, %v1486
    %v1488 = vsub.f32 1.0, %v1487
    %v1489 = vmul.f32 %v1486, %v1488
    %v1490 = vadd.f32 %v1486, %v1489
    %vm1491 = vweird.f32 %v1422
    %vm1492 = vweird.f32 %v1486
    %vm1493 = vmor %vm1491, %vm1492
    %v1494 = vsel %vm1493, %v1486, %v1490
    %v1495 = vand.u32 2147483647, %v1422
    %vm1496 = vcmp.eq.f32.partialorder %v1495, 8.507059e+37
    %v1497 = vand.u32 %v1422, 2147483648
    %v1498 = vor.u32 1.1754944e-38, %v1497
    %v1499 = vsel %vm1496, %v1498, %v1494
    %v1500 = vmul.f32 1.0, %v1499
    %v1501 = vrcp.pop %v1423
    %v1502 = vmul.f32 %v1423, %v1501
    %v1503 = vsub.f32 1.0, %v1502
    %v1504 = vmul.f32 %v1501, %v1503
    %v1505 = vadd.f32 %v1501, %v1504
    %vm1506 = vweird.f32 %v1423
    %vm1507 = vweird.f32 %v1501
    %vm1508 = vmor %vm1506, %vm1507
    %v1509 = vsel %vm1508, %v1501, %v1505
    %v1510 = vand.u32 2147483647, %v1423
    %vm1511 = vcmp.eq.f32.partialorder %v1510, 8.507059e+37
    %v1512 = vand.u32 %v1423, 2147483648
    %v1513 = vor.u32 1.1754944e-38, %v1512
    %v1514 = vsel %vm1511, %v1513, %v1509
    %v1515 = vmul.f32 1.0, %v1514
    %v1516 = vrcp.pop %v1424
    %v1517 = vmul.f32 %v1424, %v1516
    %v1518 = vsub.f32 1.0, %v1517
    %v1519 = vmul.f32 %v1516, %v1518
    %v1520 = vadd.f32 %v1516, %v1519
    %vm1521 = vweird.f32 %v1424
    %vm1522 = vweird.f32 %v1516
    %vm1523 = vmor %vm1521, %vm1522
    %v1524 = vsel %vm1523, %v1516, %v1520
    %v1525 = vand.u32 2147483647, %v1424
    %vm1526 = vcmp.eq.f32.partialorder %v1525, 8.507059e+37
    %v1527 = vand.u32 %v1424, 2147483648
    %v1528 = vor.u32 1.1754944e-38, %v1527
    %v1529 = vsel %vm1526, %v1528, %v1524
    %v1530 = vmul.f32 1.0, %v1529
    %v1531 = vrcp.pop %v1425
    %v1532 = vmul.f32 %v1425, %v1531
    %v1533 = vsub.f32 1.0, %v1532
    %v1534 = vmul.f32 %v1531, %v1533
    %v1535 = vadd.f32 %v1531, %v1534
    %vm1536 = vweird.f32 %v1425
    %vm1537 = vweird.f32 %v1531
    %vm1538 = vmor %vm1536, %vm1537
    %v1539 = vsel %vm1538, %v1531, %v1535
    %v1540 = vand.u32 2147483647, %v1425
    %vm1541 = vcmp.eq.f32.partialorder %v1540, 8.507059e+37
    %v1542 = vand.u32 %v1425, 2147483648
    %v1543 = vor.u32 1.1754944e-38, %v1542
    %v1544 = vsel %vm1541, %v1543, %v1539
    %v1545 = vmul.f32 1.0, %v1544
    %v1546 = vmul.f32 %v43, %v1440
    %v1547 = vmul.f32 %v44, %v1455
    %v1548 = vmul.f32 %v45, %v1470
    %v1549 = vmul.f32 %v46, %v1485
    %v1550 = vmul.f32 %v43, %v1500
    %v1551 = vmul.f32 %v44, %v1515
    %v1552 = vmul.f32 %v45, %v1530
    %v1553 = vmul.f32 %v46, %v1545
    %v1554 = vsel %vm124, %v1546, 0.0
    %1555 = vadd.xlane.f32.xlu0 %v1554
    %v1556 = vpop.xlane.xlu0 %1555
    %v1557 = vsel %vm124, %v1547, 0.0
    %1558 = vadd.xlane.f32.xlu0 %v1557
    %v1559 = vpop.xlane.xlu0 %1558
    %v1560 = vsel %vm124, %v1548, 0.0
    %1561 = vadd.xlane.f32.xlu0 %v1560
    %v1562 = vpop.xlane.xlu0 %1561
    %v1563 = vsel %vm124, %v1549, 0.0
    %1564 = vadd.xlane.f32.xlu0 %v1563
    %v1565 = vpop.xlane.xlu0 %1564
    %v1566 = vsel %vm124, %v1550, 0.0
    %1567 = vadd.xlane.f32.xlu0 %v1566
    %v1568 = vpop.xlane.xlu0 %1567
    %v1569 = vsel %vm124, %v1551, 0.0
    %1570 = vadd.xlane.f32.xlu0 %v1569
    %v1571 = vpop.xlane.xlu0 %1570
    %v1572 = vsel %vm124, %v1552, 0.0
    %1573 = vadd.xlane.f32.xlu0 %v1572
    %v1574 = vpop.xlane.xlu0 %1573
    %v1575 = vsel %vm124, %v1553, 0.0
    %1576 = vadd.xlane.f32.xlu0 %v1575
    %v1577 = vpop.xlane.xlu0 %1576
    %v1578 = vmul.f32 %v35, %v1440
    %v1579 = vmul.f32 %v36, %v1455
    %v1580 = vmul.f32 %v37, %v1470
    %v1581 = vmul.f32 %v38, %v1485
    %v1582 = vmul.f32 %v35, %v1500
    %v1583 = vmul.f32 %v36, %v1515
    %v1584 = vmul.f32 %v37, %v1530
    %v1585 = vmul.f32 %v38, %v1545
    %v1586 = vsel %vm124, %v1578, 0.0
    %1587 = vadd.xlane.f32.xlu0 %v1586
    %v1588 = vpop.xlane.xlu0 %1587
    %v1589 = vsel %vm124, %v1579, 0.0
    %1590 = vadd.xlane.f32.xlu0 %v1589
    %v1591 = vpop.xlane.xlu0 %1590
    %v1592 = vsel %vm124, %v1580, 0.0
    %1593 = vadd.xlane.f32.xlu0 %v1592
    %v1594 = vpop.xlane.xlu0 %1593
    %v1595 = vsel %vm124, %v1581, 0.0
    %1596 = vadd.xlane.f32.xlu0 %v1595
    %v1597 = vpop.xlane.xlu0 %1596
    %v1598 = vsel %vm124, %v1582, 0.0
    %1599 = vadd.xlane.f32.xlu0 %v1598
    %v1600 = vpop.xlane.xlu0 %1599
    %v1601 = vsel %vm124, %v1583, 0.0
    %1602 = vadd.xlane.f32.xlu0 %v1601
    %v1603 = vpop.xlane.xlu0 %1602
    %v1604 = vsel %vm124, %v1584, 0.0
    %1605 = vadd.xlane.f32.xlu0 %v1604
    %v1606 = vpop.xlane.xlu0 %1605
    %v1607 = vsel %vm124, %v1585, 0.0
    %1608 = vadd.xlane.f32.xlu0 %v1607
    %v1609 = vpop.xlane.xlu0 %1608
    %v1610 = vmul.f32 %v165, %v1371
    %v1611 = vadd.f32 %v1610, %v172
    %v1620 = vperm.slane %v1556, %v429
    %v1621 = vperm.slane %v1559, %v431
    %v1622 = vsel %vm433, %v1621, %v1620
    %v1623 = vperm.slane %v1562, %v435
    %v1624 = vsel %vm437, %v1623, %v1622
    %v1625 = vperm.slane %v1565, %v439
    %v1626 = vsel %vm441, %v1625, %v1624
    %v1627 = vperm.slane %v1568, %v429
    %v1628 = vperm.slane %v1571, %v431
    %v1629 = vsel %vm433, %v1628, %v1627
    %v1630 = vperm.slane %v1574, %v435
    %v1631 = vsel %vm437, %v1630, %v1629
    %v1632 = vperm.slane %v1577, %v439
    %v1633 = vsel %vm441, %v1632, %v1631
    %v1634 = vsel %vm169, %v1633, %v1626
    %v1636 = vadd.f32 %v1611, %v1634
    %v1645 = vperm.slane %v1588, %v429
    %v1646 = vperm.slane %v1591, %v431
    %v1647 = vsel %vm433, %v1646, %v1645
    %v1648 = vperm.slane %v1594, %v435
    %v1649 = vsel %vm437, %v1648, %v1647
    %v1650 = vperm.slane %v1597, %v439
    %v1651 = vsel %vm441, %v1650, %v1649
    %v1652 = vperm.slane %v1600, %v429
    %v1653 = vperm.slane %v1603, %v431
    %v1654 = vsel %vm433, %v1653, %v1652
    %v1655 = vperm.slane %v1606, %v435
    %v1656 = vsel %vm437, %v1655, %v1654
    %v1657 = vperm.slane %v1609, %v439
    %v1658 = vsel %vm441, %v1657, %v1656
    %v1659 = vsel %vm169, %v1658, %v1651
    %v1661 = vadd.f32 %v179, %v1659
    %v1662 = vadd.f32 %v1661, 1e-08
    %v1663 = vrcp.pop %v1662
    %v1664 = vmul.f32 %v1662, %v1663
    %v1665 = vsub.f32 2.0, %v1664
    %v1666 = vmul.f32 %v1663, %v1665
    %v1667 = vmul.f32 %v1636, %v1666
    %v1669 = vrot.slane %v1667, 1
    %v1670 = vperm.slane %v1667, 0
    %v1671 = vperm.slane %v1669, 0
    %v1674 = vsub.f32 %v1670, %v31
    %v1675 = vsub.f32 %v1670, %v32
    %v1676 = vsub.f32 %v1670, %v33
    %v1677 = vsub.f32 %v1670, %v34
    %v1678 = vsub.f32 %v1671, %v31
    %v1679 = vsub.f32 %v1671, %v32
    %v1680 = vsub.f32 %v1671, %v33
    %v1681 = vsub.f32 %v1671, %v34
    %v1682 = vmul.f32 %v1674, %v27
    %v1683 = vmul.f32 %v1675, %v28
    %v1684 = vmul.f32 %v1676, %v29
    %v1685 = vmul.f32 %v1677, %v30
    %v1686 = vmul.f32 %v1678, %v27
    %v1687 = vmul.f32 %v1679, %v28
    %v1688 = vmul.f32 %v1680, %v29
    %v1689 = vmul.f32 %v1681, %v30
    %v1690 = vxor.u32 %v1682, 2147483648
    %v1691 = vxor.u32 %v1683, 2147483648
    %v1692 = vxor.u32 %v1684, 2147483648
    %v1693 = vxor.u32 %v1685, 2147483648
    %v1694 = vxor.u32 %v1686, 2147483648
    %v1695 = vxor.u32 %v1687, 2147483648
    %v1696 = vxor.u32 %v1688, 2147483648
    %v1697 = vxor.u32 %v1689, 2147483648
    %v1698 = vmul.f32 %v1690, 1.442695
    %v1699 = vpow.pop %v1698
    %v1700 = vmul.f32 %v1691, 1.442695
    %v1701 = vpow.pop %v1700
    %v1702 = vmul.f32 %v1692, 1.442695
    %v1703 = vpow.pop %v1702
    %v1704 = vmul.f32 %v1693, 1.442695
    %v1705 = vpow.pop %v1704
    %v1706 = vmul.f32 %v1694, 1.442695
    %v1707 = vpow.pop %v1706
    %v1708 = vmul.f32 %v1695, 1.442695
    %v1709 = vpow.pop %v1708
    %v1710 = vmul.f32 %v1696, 1.442695
    %v1711 = vpow.pop %v1710
    %v1712 = vmul.f32 %v1697, 1.442695
    %v1713 = vpow.pop %v1712
    %v1714 = vadd.f32 %v1699, 1.0
    %v1715 = vadd.f32 %v1701, 1.0
    %v1716 = vadd.f32 %v1703, 1.0
    %v1717 = vadd.f32 %v1705, 1.0
    %v1718 = vadd.f32 %v1707, 1.0
    %v1719 = vadd.f32 %v1709, 1.0
    %v1720 = vadd.f32 %v1711, 1.0
    %v1721 = vadd.f32 %v1713, 1.0
    %v1722 = vrcp.pop %v1714
    %v1723 = vmul.f32 %v1714, %v1722
    %v1724 = vsub.f32 1.0, %v1723
    %v1725 = vmul.f32 %v1722, %v1724
    %v1726 = vadd.f32 %v1722, %v1725
    %vm1727 = vweird.f32 %v1714
    %vm1728 = vweird.f32 %v1722
    %vm1729 = vmor %vm1727, %vm1728
    %v1730 = vsel %vm1729, %v1722, %v1726
    %v1731 = vand.u32 2147483647, %v1714
    %vm1732 = vcmp.eq.f32.partialorder %v1731, 8.507059e+37
    %v1733 = vand.u32 %v1714, 2147483648
    %v1734 = vor.u32 1.1754944e-38, %v1733
    %v1735 = vsel %vm1732, %v1734, %v1730
    %v1736 = vmul.f32 1.0, %v1735
    %v1737 = vrcp.pop %v1715
    %v1738 = vmul.f32 %v1715, %v1737
    %v1739 = vsub.f32 1.0, %v1738
    %v1740 = vmul.f32 %v1737, %v1739
    %v1741 = vadd.f32 %v1737, %v1740
    %vm1742 = vweird.f32 %v1715
    %vm1743 = vweird.f32 %v1737
    %vm1744 = vmor %vm1742, %vm1743
    %v1745 = vsel %vm1744, %v1737, %v1741
    %v1746 = vand.u32 2147483647, %v1715
    %vm1747 = vcmp.eq.f32.partialorder %v1746, 8.507059e+37
    %v1748 = vand.u32 %v1715, 2147483648
    %v1749 = vor.u32 1.1754944e-38, %v1748
    %v1750 = vsel %vm1747, %v1749, %v1745
    %v1751 = vmul.f32 1.0, %v1750
    %v1752 = vrcp.pop %v1716
    %v1753 = vmul.f32 %v1716, %v1752
    %v1754 = vsub.f32 1.0, %v1753
    %v1755 = vmul.f32 %v1752, %v1754
    %v1756 = vadd.f32 %v1752, %v1755
    %vm1757 = vweird.f32 %v1716
    %vm1758 = vweird.f32 %v1752
    %vm1759 = vmor %vm1757, %vm1758
    %v1760 = vsel %vm1759, %v1752, %v1756
    %v1761 = vand.u32 2147483647, %v1716
    %vm1762 = vcmp.eq.f32.partialorder %v1761, 8.507059e+37
    %v1763 = vand.u32 %v1716, 2147483648
    %v1764 = vor.u32 1.1754944e-38, %v1763
    %v1765 = vsel %vm1762, %v1764, %v1760
    %v1766 = vmul.f32 1.0, %v1765
    %v1767 = vrcp.pop %v1717
    %v1768 = vmul.f32 %v1717, %v1767
    %v1769 = vsub.f32 1.0, %v1768
    %v1770 = vmul.f32 %v1767, %v1769
    %v1771 = vadd.f32 %v1767, %v1770
    %vm1772 = vweird.f32 %v1717
    %vm1773 = vweird.f32 %v1767
    %vm1774 = vmor %vm1772, %vm1773
    %v1775 = vsel %vm1774, %v1767, %v1771
    %v1776 = vand.u32 2147483647, %v1717
    %vm1777 = vcmp.eq.f32.partialorder %v1776, 8.507059e+37
    %v1778 = vand.u32 %v1717, 2147483648
    %v1779 = vor.u32 1.1754944e-38, %v1778
    %v1780 = vsel %vm1777, %v1779, %v1775
    %v1781 = vmul.f32 1.0, %v1780
    %v1782 = vrcp.pop %v1718
    %v1783 = vmul.f32 %v1718, %v1782
    %v1784 = vsub.f32 1.0, %v1783
    %v1785 = vmul.f32 %v1782, %v1784
    %v1786 = vadd.f32 %v1782, %v1785
    %vm1787 = vweird.f32 %v1718
    %vm1788 = vweird.f32 %v1782
    %vm1789 = vmor %vm1787, %vm1788
    %v1790 = vsel %vm1789, %v1782, %v1786
    %v1791 = vand.u32 2147483647, %v1718
    %vm1792 = vcmp.eq.f32.partialorder %v1791, 8.507059e+37
    %v1793 = vand.u32 %v1718, 2147483648
    %v1794 = vor.u32 1.1754944e-38, %v1793
    %v1795 = vsel %vm1792, %v1794, %v1790
    %v1796 = vmul.f32 1.0, %v1795
    %v1797 = vrcp.pop %v1719
    %v1798 = vmul.f32 %v1719, %v1797
    %v1799 = vsub.f32 1.0, %v1798
    %v1800 = vmul.f32 %v1797, %v1799
    %v1801 = vadd.f32 %v1797, %v1800
    %vm1802 = vweird.f32 %v1719
    %vm1803 = vweird.f32 %v1797
    %vm1804 = vmor %vm1802, %vm1803
    %v1805 = vsel %vm1804, %v1797, %v1801
    %v1806 = vand.u32 2147483647, %v1719
    %vm1807 = vcmp.eq.f32.partialorder %v1806, 8.507059e+37
    %v1808 = vand.u32 %v1719, 2147483648
    %v1809 = vor.u32 1.1754944e-38, %v1808
    %v1810 = vsel %vm1807, %v1809, %v1805
    %v1811 = vmul.f32 1.0, %v1810
    %v1812 = vrcp.pop %v1720
    %v1813 = vmul.f32 %v1720, %v1812
    %v1814 = vsub.f32 1.0, %v1813
    %v1815 = vmul.f32 %v1812, %v1814
    %v1816 = vadd.f32 %v1812, %v1815
    %vm1817 = vweird.f32 %v1720
    %vm1818 = vweird.f32 %v1812
    %vm1819 = vmor %vm1817, %vm1818
    %v1820 = vsel %vm1819, %v1812, %v1816
    %v1821 = vand.u32 2147483647, %v1720
    %vm1822 = vcmp.eq.f32.partialorder %v1821, 8.507059e+37
    %v1823 = vand.u32 %v1720, 2147483648
    %v1824 = vor.u32 1.1754944e-38, %v1823
    %v1825 = vsel %vm1822, %v1824, %v1820
    %v1826 = vmul.f32 1.0, %v1825
    %v1827 = vrcp.pop %v1721
    %v1828 = vmul.f32 %v1721, %v1827
    %v1829 = vsub.f32 1.0, %v1828
    %v1830 = vmul.f32 %v1827, %v1829
    %v1831 = vadd.f32 %v1827, %v1830
    %vm1832 = vweird.f32 %v1721
    %vm1833 = vweird.f32 %v1827
    %vm1834 = vmor %vm1832, %vm1833
    %v1835 = vsel %vm1834, %v1827, %v1831
    %v1836 = vand.u32 2147483647, %v1721
    %vm1837 = vcmp.eq.f32.partialorder %v1836, 8.507059e+37
    %v1838 = vand.u32 %v1721, 2147483648
    %v1839 = vor.u32 1.1754944e-38, %v1838
    %v1840 = vsel %vm1837, %v1839, %v1835
    %v1841 = vmul.f32 1.0, %v1840
    %v1842 = vmul.f32 %v43, %v1736
    %v1843 = vmul.f32 %v44, %v1751
    %v1844 = vmul.f32 %v45, %v1766
    %v1845 = vmul.f32 %v46, %v1781
    %v1846 = vmul.f32 %v43, %v1796
    %v1847 = vmul.f32 %v44, %v1811
    %v1848 = vmul.f32 %v45, %v1826
    %v1849 = vmul.f32 %v46, %v1841
    %v1850 = vsel %vm124, %v1842, 0.0
    %1851 = vadd.xlane.f32.xlu0 %v1850
    %v1852 = vpop.xlane.xlu0 %1851
    %v1853 = vsel %vm124, %v1843, 0.0
    %1854 = vadd.xlane.f32.xlu0 %v1853
    %v1855 = vpop.xlane.xlu0 %1854
    %v1856 = vsel %vm124, %v1844, 0.0
    %1857 = vadd.xlane.f32.xlu0 %v1856
    %v1858 = vpop.xlane.xlu0 %1857
    %v1859 = vsel %vm124, %v1845, 0.0
    %1860 = vadd.xlane.f32.xlu0 %v1859
    %v1861 = vpop.xlane.xlu0 %1860
    %v1862 = vsel %vm124, %v1846, 0.0
    %1863 = vadd.xlane.f32.xlu0 %v1862
    %v1864 = vpop.xlane.xlu0 %1863
    %v1865 = vsel %vm124, %v1847, 0.0
    %1866 = vadd.xlane.f32.xlu0 %v1865
    %v1867 = vpop.xlane.xlu0 %1866
    %v1868 = vsel %vm124, %v1848, 0.0
    %1869 = vadd.xlane.f32.xlu0 %v1868
    %v1870 = vpop.xlane.xlu0 %1869
    %v1871 = vsel %vm124, %v1849, 0.0
    %1872 = vadd.xlane.f32.xlu0 %v1871
    %v1873 = vpop.xlane.xlu0 %1872
    %v1874 = vmul.f32 %v35, %v1736
    %v1875 = vmul.f32 %v36, %v1751
    %v1876 = vmul.f32 %v37, %v1766
    %v1877 = vmul.f32 %v38, %v1781
    %v1878 = vmul.f32 %v35, %v1796
    %v1879 = vmul.f32 %v36, %v1811
    %v1880 = vmul.f32 %v37, %v1826
    %v1881 = vmul.f32 %v38, %v1841
    %v1882 = vsel %vm124, %v1874, 0.0
    %1883 = vadd.xlane.f32.xlu0 %v1882
    %v1884 = vpop.xlane.xlu0 %1883
    %v1885 = vsel %vm124, %v1875, 0.0
    %1886 = vadd.xlane.f32.xlu0 %v1885
    %v1887 = vpop.xlane.xlu0 %1886
    %v1888 = vsel %vm124, %v1876, 0.0
    %1889 = vadd.xlane.f32.xlu0 %v1888
    %v1890 = vpop.xlane.xlu0 %1889
    %v1891 = vsel %vm124, %v1877, 0.0
    %1892 = vadd.xlane.f32.xlu0 %v1891
    %v1893 = vpop.xlane.xlu0 %1892
    %v1894 = vsel %vm124, %v1878, 0.0
    %1895 = vadd.xlane.f32.xlu0 %v1894
    %v1896 = vpop.xlane.xlu0 %1895
    %v1897 = vsel %vm124, %v1879, 0.0
    %1898 = vadd.xlane.f32.xlu0 %v1897
    %v1899 = vpop.xlane.xlu0 %1898
    %v1900 = vsel %vm124, %v1880, 0.0
    %1901 = vadd.xlane.f32.xlu0 %v1900
    %v1902 = vpop.xlane.xlu0 %1901
    %v1903 = vsel %vm124, %v1881, 0.0
    %1904 = vadd.xlane.f32.xlu0 %v1903
    %v1905 = vpop.xlane.xlu0 %1904
    %v1906 = vmul.f32 %v165, %v1667
    %v1907 = vadd.f32 %v1906, %v172
    %v1916 = vperm.slane %v1852, %v429
    %v1917 = vperm.slane %v1855, %v431
    %v1918 = vsel %vm433, %v1917, %v1916
    %v1919 = vperm.slane %v1858, %v435
    %v1920 = vsel %vm437, %v1919, %v1918
    %v1921 = vperm.slane %v1861, %v439
    %v1922 = vsel %vm441, %v1921, %v1920
    %v1923 = vperm.slane %v1864, %v429
    %v1924 = vperm.slane %v1867, %v431
    %v1925 = vsel %vm433, %v1924, %v1923
    %v1926 = vperm.slane %v1870, %v435
    %v1927 = vsel %vm437, %v1926, %v1925
    %v1928 = vperm.slane %v1873, %v439
    %v1929 = vsel %vm441, %v1928, %v1927
    %v1930 = vsel %vm169, %v1929, %v1922
    %v1932 = vadd.f32 %v1907, %v1930
    %v1941 = vperm.slane %v1884, %v429
    %v1942 = vperm.slane %v1887, %v431
    %v1943 = vsel %vm433, %v1942, %v1941
    %v1944 = vperm.slane %v1890, %v435
    %v1945 = vsel %vm437, %v1944, %v1943
    %v1946 = vperm.slane %v1893, %v439
    %v1947 = vsel %vm441, %v1946, %v1945
    %v1948 = vperm.slane %v1896, %v429
    %v1949 = vperm.slane %v1899, %v431
    %v1950 = vsel %vm433, %v1949, %v1948
    %v1951 = vperm.slane %v1902, %v435
    %v1952 = vsel %vm437, %v1951, %v1950
    %v1953 = vperm.slane %v1905, %v439
    %v1954 = vsel %vm441, %v1953, %v1952
    %v1955 = vsel %vm169, %v1954, %v1947
    %v1957 = vadd.f32 %v179, %v1955
    %v1958 = vadd.f32 %v1957, 1e-08
    %v1959 = vrcp.pop %v1958
    %v1960 = vmul.f32 %v1958, %v1959
    %v1961 = vsub.f32 2.0, %v1960
    %v1962 = vmul.f32 %v1959, %v1961
    %v1963 = vmul.f32 %v1932, %v1962
    %vm1964 = vcmask 254976
    %1965 = vst.msk [vmem:[#allocation2] sm:$0x3] %vm1964, %v1963
    // Predicated region
    $region30: #{tpu_custom_call.1} parent=1 // pred_check
      _
    $region31: #{tpu_custom_call.1} parent=1 // pred_check_branch
      %1967 = sbr.rel (0) target = $region33
    $region32: #{tpu_custom_call.1} parent=1 // pred_region
      %1969 = vsyncadd [#allocation3], 0
      %s1971 = sshll.u32 [#allocation2], 4
      %s1972 = int_to_ptr.vmem [resolvable:$true] %s1971
      %s1973 = sshll.u32 %s7, 4
      %s1974 = int_to_ptr.hbm [resolvable:$true] %s1973
      %1976 = dma.vmem_to_hbm [thread:$0]  %s1972, 32, %s1974, [#allocation3]
    $region33: #{tpu_custom_call.1} parent=1 // pred_fallthru
      _
    // Predicated region
    $region34: #{tpu_custom_call.1} parent=1 // pred_check
      _
    $region35: #{tpu_custom_call.1} parent=1 // pred_check_branch
      %1978 = sbr.rel (0) target = $region37
    $region36: #{tpu_custom_call.1} parent=1 // pred_region
      %1980 = dma.done [#allocation3], 32
    $region37: #{tpu_custom_call.1} parent=1 // pred_fallthru
      _
    %1981 = vsyncpa [#allocation3], 1

</llo_original>
